<compile_context>
chip_gen: v7x
topology: tpu7x:2x2x1
jax: 0.10.0
libtpu: 0.0.40
codegen_flags: <defaults>
</compile_context>

<pallas_src>
import numpy as np
import jax
import jax.numpy as jnp
from jax.experimental import pallas as pl
from jax.experimental.pallas import tpu as pltpu

N_WIRES = 4
N_STATES = 16            # 2**4
N_PATCHES = 4
POOL_K = 6
IMG = 28
QF_BLOCKS = 5            # TrainableQuanvFilter U3CU3Layer0 n_blocks
QFC_BLOCKS = 4           # QFC U3CU3Layer0 n_blocks


# ----------------------------- Pallas kernel ---------------------------------
def model2_kernel(x_ref, pool_ref, qfbig_ref, sbig_ref, abig_ref, meas_ref, o_ref):
    TB = x_ref.shape[0]

    def mm(a, b):
        # default MXU precision, f32 accumulation
        return jnp.dot(a, b, preferred_element_type=jnp.float32)

    # pooled half-angles; column = 4*patch + wire (0.5 and 1/36 folded into pool_ref)
    hf = mm(x_ref[...], pool_ref[...])                        # (TB, 16)
    ch, sh = jnp.cos(hf), jnp.sin(hf)

    # per-wire basis bit (wire 0 = MSB of the basis index), shared by both circuits
    idx = jax.lax.broadcasted_iota(jnp.int32, (TB, N_STATES), 1)
    bit1 = [((idx >> (N_WIRES - 1 - w)) & 1) == 1 for w in range(N_WIRES)]

    # --- TrainableQuanvFilter: 4 independent patches, RY-only -> real product states ---
    states = []
    for p in range(N_PATCHES):
        st = jnp.where(bit1[0], sh[:, 4 * p:4 * p + 1], ch[:, 4 * p:4 * p + 1])
        for w in range(1, N_WIRES):
            st = st * jnp.where(bit1[w], sh[:, 4 * p + w:4 * p + w + 1],
                                ch[:, 4 * p + w:4 * p + w + 1])
        states.append(st)                                     # each (TB, 16), real
    st_all = jnp.concatenate(states, axis=1)                  # (TB, 64)

    # all 4 ansatz applications as ONE block-diagonal real matmul:
    #   z[:, 32p:32p+32] = [Re | Im](state_p @ A_qf^T)
    z = mm(st_all, qfbig_ref[...])                            # (TB, 128)
    # |amp|^2 -> 0.5*<Z_w>, scattered to QFC-angle column 4*w + p, all patches at once
    t_half = mm(z * z, sbig_ref[...])                         # (TB, 16)

    # --- QFC encoder '4x4_ryzxy':  psi_w = RY(t4) RX(t3) RZ(t2) RY(t1) |0> ---
    cT, sT = jnp.cos(t_half), jnp.sin(t_half)
    c1, s1 = cT[:, 0:4], sT[:, 0:4]
    c2, s2 = cT[:, 4:8], sT[:, 4:8]
    c3, s3 = cT[:, 8:12], sT[:, 8:12]
    c4, s4 = cT[:, 12:16], sT[:, 12:16]

    a_re, a_im = c1 * c2, -c1 * s2                            # RY then RZ
    b_re, b_im = s1 * c2, s1 * s2
    ar2 = c3 * a_re + s3 * b_im                               # RX
    ai2 = c3 * a_im - s3 * b_re
    br2 = s3 * a_im + c3 * b_re
    bi2 = -s3 * a_re + c3 * b_im
    a_re = c4 * ar2 - s4 * br2                                # RY
    a_im = c4 * ai2 - s4 * bi2
    b_re = s4 * ar2 + c4 * br2
    b_im = s4 * ai2 + c4 * bi2                                # each (TB, 4)

    # complex product state over the 4 QFC wires (wire 0 = MSB)
    st_re = jnp.where(bit1[0], b_re[:, 0:1], a_re[:, 0:1])
    st_im = jnp.where(bit1[0], b_im[:, 0:1], a_im[:, 0:1])
    for w in range(1, N_WIRES):
        sel_re = jnp.where(bit1[w], b_re[:, w:w + 1], a_re[:, w:w + 1])
        sel_im = jnp.where(bit1[w], b_im[:, w:w + 1], a_im[:, w:w + 1])
        nr = st_re * sel_re - st_im * sel_im
        ni = st_re * sel_im + st_im * sel_re
        st_re, st_im = nr, ni                                 # (TB, 16) each

    # --- QFC ansatz (fixed unitary) + MeasureAll(PauliZ), packed real matmuls ---
    st_ri = jnp.concatenate([st_re, st_im], axis=1)           # (TB, 32)
    zq = mm(st_ri, abig_ref[...])                             # (TB, 32) = [Re | Im]
    expz = mm(zq * zq, meas_ref[...])                         # (TB, 4)

    # --- log_softmax over the 4 classes ---
    m = jnp.max(expz, axis=-1, keepdims=True)
    e = jnp.exp(expz - m)
    lse = jnp.log(jnp.sum(e, axis=-1, keepdims=True)) + m
    o_ref[...] = expz - lse


# ------------------------------- wrapper --------------------------------------
def _round_up(n, m):
    return ((n + m - 1) // m) * m


def model2_forward(x_nchw, consts, *, tile_b=1024):
    pool, qf_big, sbig, abig, meas = consts
    B = x_nchw.shape[0]
    x_flat = x_nchw.reshape(B, -1).astype(jnp.float32)        # (B, 784), row-major == torch .view
    assert x_flat.shape[1] == IMG * IMG

    TB = min(_round_up(tile_b, 8), _round_up(B, 8))           # sublane-aligned batch tile
    Bp = _round_up(B, TB)
    if Bp != B:
        x_flat = jnp.pad(x_flat, ((0, Bp - B), (0, 0)))

    out = pl.pallas_call(
        model2_kernel,
        out_shape=jax.ShapeDtypeStruct((Bp, N_WIRES), jnp.float32),
        grid_spec=pltpu.PrefetchScalarGridSpec(
            num_scalar_prefetch=0,
            grid=(Bp // TB,),
            in_specs=[
                pl.BlockSpec((TB, IMG * IMG), lambda i: (i, 0)),   # batch-tiled, pipelined
                pl.BlockSpec(pool.shape, lambda i: (0, 0)),        # constants stay resident
                pl.BlockSpec(qf_big.shape, lambda i: (0, 0)),
                pl.BlockSpec(sbig.shape, lambda i: (0, 0)),
                pl.BlockSpec(abig.shape, lambda i: (0, 0)),
                pl.BlockSpec(meas.shape, lambda i: (0, 0)),
            ],
            out_specs=pl.BlockSpec((TB, N_WIRES), lambda i: (i, 0)),
        ),
        compiler_params=pltpu.CompilerParams(
            dimension_semantics=("parallel",)),                    # megacore sharding
    )(x_flat, pool, qf_big, sbig, abig, meas)
    return out[:B]


# --------------------- host-side parameter / constant setup -------------------
def u3_mat(theta, phi, lam):
    ct, st = np.cos(theta / 2.0), np.sin(theta / 2.0)
    return np.array(
        [[ct, -np.exp(1j * lam) * st],
         [np.exp(1j * phi) * st, np.exp(1j * (phi + lam)) * ct]],
        dtype=np.complex128)


def _kron_all(ms):
    out = ms[0]
    for m in ms[1:]:
        out = np.kron(out, m)
    return out


def _embed_1q(u, wire):
    ms = [np.eye(2, dtype=np.complex128) for _ in range(N_WIRES)]
    ms[wire] = u
    return _kron_all(ms)


def _embed_cu3(u, ctrl, tgt):
    P0 = np.diag([1.0, 0.0]).astype(np.complex128)
    P1 = np.diag([0.0, 1.0]).astype(np.complex128)
    m0 = [np.eye(2, dtype=np.complex128) for _ in range(N_WIRES)]
    m1 = [np.eye(2, dtype=np.complex128) for _ in range(N_WIRES)]
    m0[ctrl] = P0
    m1[ctrl] = P1
    m1[tgt] = u
    return _kron_all(m0) + _kron_all(m1)


def build_u3cu3_unitary(u3_params, cu3_params, n_blocks):
    """U3CU3Layer0: per block, U3 on every wire then CU3 on (0,1),(1,2),(2,3),(3,0)."""
    A = np.eye(N_STATES, dtype=np.complex128)
    pairs = [(0, 1), (1, 2), (2, 3), (3, 0)]
    for b in range(n_blocks):
        for w in range(N_WIRES):
            A = _embed_1q(u3_mat(*u3_params[b, w]), w) @ A
        for k, (c, t) in enumerate(pairs):
            A = _embed_cu3(u3_mat(*cu3_params[b, k]), c, t) @ A
    return A


def _sign_vec(w):
    # <Z_w> signs per basis state (wire 0 = MSB)
    return np.array([1.0 - 2.0 * ((i >> (N_WIRES - 1 - w)) & 1)
                     for i in range(N_STATES)], np.float64)


def build_constants(A_qf, A_qfc):
    # pooling matrix: x_flat(784) @ pool -> 0.5 * encoder angle, column = 4*patch + wire
    patches = [(0, 0), (0, 2), (2, 0), (2, 2)]           # (c, r) of top-left pooled cell
    pool = np.zeros((IMG * IMG, N_STATES), np.float64)
    for p, (c, r) in enumerate(patches):
        cells = [(c, r), (c, r + 1), (c + 1, r), (c + 1, r + 1)]
        for w, (ci, rj) in enumerate(cells):
            for dh in range(POOL_K):
                for dw in range(POOL_K):
                    row = (POOL_K * ci + dh) * IMG + (POOL_K * rj + dw)
                    pool[row, 4 * p + w] = 0.5 / (POOL_K * POOL_K)

    # quanv ansatz packed as block-diagonal [Re | Im] of A_qf^T:
    #   (real states of all 4 patches) @ qf_big -> per-patch [Re | Im](state @ A^T)
    AT = A_qf.T
    qf_ri = np.concatenate([AT.real, AT.imag], axis=1)   # (16, 32)
    qf_big = np.zeros((N_PATCHES * N_STATES, N_PATCHES * 32), np.float64)   # (64, 128)
    for p in range(N_PATCHES):
        qf_big[16 * p:16 * p + 16, 32 * p:32 * p + 32] = qf_ri

    # all-patch measurement: (z*z) @ sbig -> 0.5*<Z_w> scattered to column 4*w + p
    sbig = np.zeros((N_PATCHES * 32, N_STATES), np.float64)                 # (128, 16)
    for p in range(N_PATCHES):
        for w in range(N_WIRES):
            sv = 0.5 * _sign_vec(w)
            sbig[32 * p:32 * p + 16, 4 * w + p] = sv
            sbig[32 * p + 16:32 * p + 32, 4 * w + p] = sv

    # QFC ansatz: [st_re | st_im] @ abig = [Re | Im](st @ A^T)
    ATc = A_qfc.T
    abig = np.block([[ATc.real, ATc.imag], [-ATc.imag, ATc.real]])          # (32, 32)

    # |amp|^2 @ signs directly from the packed [Re | Im] layout
    S = np.stack([_sign_vec(w) for w in range(N_WIRES)], axis=1)            # (16, 4)
    meas = np.concatenate([S, S], axis=0)                                   # (32, 4)

    to_f32 = lambda a: jnp.asarray(np.asarray(a, np.float32))
    return tuple(map(to_f32, (pool, qf_big, sbig, abig, meas)))


# ------------------------ pure-numpy reference (host) --------------------------
def model2_reference(x_nchw, A_qf, A_qfc):
    x = np.asarray(x_nchw, np.float64).reshape(-1, IMG, IMG)
    B = x.shape[0]
    # F.avg_pool2d(x, 6): kernel 6, stride 6, rows/cols 24..27 dropped
    pooled = x[:, :24, :24].reshape(B, 4, POOL_K, 4, POOL_K).mean(axis=(2, 4))

    def ry(t):
        c, s = np.cos(t / 2), np.sin(t / 2)
        return np.array([[c, -s], [s, c]], np.complex128)

    def rz(t):
        return np.diag([np.exp(-1j * t / 2), np.exp(1j * t / 2)])

    def rx(t):
        c, s = np.cos(t / 2), np.sin(t / 2)
        return np.array([[c, -1j * s], [-1j * s, c]], np.complex128)

    signs = np.stack([_sign_vec(w) for w in range(N_WIRES)], axis=1)  # (16, 4)

    res = np.zeros((B, N_PATCHES, N_WIRES))                    # [b, patch, wire]
    for b in range(B):
        pidx = 0
        for c in range(0, 4, 2):
            for r in range(0, 4, 2):
                data = [pooled[b, c, r], pooled[b, c, r + 1],
                        pooled[b, c + 1, r], pooled[b, c + 1, r + 1]]
                st = np.array([1.0], np.complex128)
                for w in range(N_WIRES):
                    st = np.kron(st, ry(data[w]) @ np.array([1.0, 0.0]))
                st = A_qf @ st
                res[b, pidx] = (np.abs(st) ** 2) @ signs
                pidx += 1
    qfc_in = np.transpose(res, (0, 2, 1)).reshape(B, 16)       # column = 4*wire + patch

    out = np.zeros((B, N_WIRES))
    for b in range(B):
        st = np.array([1.0], np.complex128)
        for w in range(N_WIRES):
            t1, t2, t3, t4 = (qfc_in[b, w], qfc_in[b, 4 + w],
                              qfc_in[b, 8 + w], qfc_in[b, 12 + w])
            psi = ry(t4) @ rx(t3) @ rz(t2) @ ry(t1) @ np.array([1.0, 0.0], np.complex128)
            st = np.kron(st, psi)
        st = A_qfc @ st
        out[b] = (np.abs(st) ** 2) @ signs
    m = out.max(axis=1, keepdims=True)
    lse = np.log(np.exp(out - m).sum(axis=1, keepdims=True)) + m
    return out - lse


# ---------------------------------- main ---------------------------------------
if __name__ == "__main__":
    # TODO(synk): the use_qiskit=True path (QiskitProcessor hardware execution) has no
    # Pallas equivalent; only the default analytic-statevector path is implemented.
    key = jax.random.PRNGKey(0)
    kx, k1, k2, k3, k4 = jax.random.split(key, 5)

    # smallest shape consistent with x.view(-1, 28, 28): B x 1 x 28 x 28 (NCHW)
    B, C, H, W = 2, 1, IMG, IMG
    x = jax.random.uniform(kx, (B, C, H, W), dtype=jnp.float32)

    # deterministic "trainable" params of the two U3CU3Layer0 ansatzes
    u3_qf = np.asarray(jax.random.uniform(k1, (QF_BLOCKS, N_WIRES, 3),
                                          minval=-np.pi, maxval=np.pi))
    cu3_qf = np.asarray(jax.random.uniform(k2, (QF_BLOCKS, N_WIRES, 3),
                                           minval=-np.pi, maxval=np.pi))
    u3_qfc = np.asarray(jax.random.uniform(k3, (QFC_BLOCKS, N_WIRES, 3),
                                           minval=-np.pi, maxval=np.pi))
    cu3_qfc = np.asarray(jax.random.uniform(k4, (QFC_BLOCKS, N_WIRES, 3),
                                            minval=-np.pi, maxval=np.pi))

    A_qf = build_u3cu3_unitary(u3_qf, cu3_qf, QF_BLOCKS)
    A_qfc = build_u3cu3_unitary(u3_qfc, cu3_qfc, QFC_BLOCKS)
    consts = build_constants(A_qf, A_qfc)

    out = jax.block_until_ready(model2_forward(x, consts))

    assert out.shape == (B, N_WIRES)
    assert bool(jnp.all(jnp.isfinite(out)))
    # log_softmax rows must exponentiate to a probability simplex
    assert bool(jnp.allclose(jnp.sum(jnp.exp(out), axis=-1), 1.0, atol=1e-3))

    # independent full-simulation reference (loose tol: MXU default precision is bf16-input)
    ref = model2_reference(np.asarray(x), A_qf, A_qfc)
    err = float(np.max(np.abs(np.asarray(out) - ref)))
    assert err < 8e-2, f"max abs error vs reference: {err}"

    print("KERNEL_OK")
</pallas_src>

<mosaic_0001>
module attributes {stable_mosaic.version = 11 : i64} {
  func.func @model2_kernel(%arg0: i32, %arg1: memref<8x784xf32, #tpu.memory_space<vmem>>, %arg2: memref<784x16xf32, #tpu.memory_space<vmem>>, %arg3: memref<64x128xf32, #tpu.memory_space<vmem>>, %arg4: memref<128x16xf32, #tpu.memory_space<vmem>>, %arg5: memref<32x32xf32, #tpu.memory_space<vmem>>, %arg6: memref<32x4xf32, #tpu.memory_space<vmem>>, %arg7: memref<8x4xf32, #tpu.memory_space<vmem>>) attributes {dimension_semantics = [#tpu.dimension_semantics<parallel>], iteration_bounds = array<i64: 1>, scalar_prefetch = 0 : i64, scratch_operands = 0 : i64, tpu.core_type = #tpu.core_type<tc>, window_params = [{transform_indices = @transform_0, window_bounds = array<i64: 8, 784>}, {pipeline_mode = #tpu.pipeline_mode<synchronous>, transform_indices = @transform_1, window_bounds = array<i64: 784, 16>}, {pipeline_mode = #tpu.pipeline_mode<synchronous>, transform_indices = @transform_2, window_bounds = array<i64: 64, 128>}, {pipeline_mode = #tpu.pipeline_mode<synchronous>, transform_indices = @transform_3, window_bounds = array<i64: 128, 16>}, {pipeline_mode = #tpu.pipeline_mode<synchronous>, transform_indices = @transform_4, window_bounds = array<i64: 32, 32>}, {pipeline_mode = #tpu.pipeline_mode<synchronous>, transform_indices = @transform_5, window_bounds = array<i64: 32, 4>}, {transform_indices = @transform_6, window_bounds = array<i64: 8, 4>}]} {
    %c0 = arith.constant 0 : index
    %c0_0 = arith.constant 0 : index
    %0 = vector.load %arg1[%c0, %c0_0] : memref<8x784xf32, #tpu.memory_space<vmem>>, vector<8x784xf32>
    %c0_1 = arith.constant 0 : index
    %c0_2 = arith.constant 0 : index
    %1 = vector.load %arg2[%c0_1, %c0_2] : memref<784x16xf32, #tpu.memory_space<vmem>>, vector<784x16xf32>
    %cst = arith.constant dense<0.000000e+00> : vector<8x16xf32>
    %2 = tpu.matmul %0, %1, %cst {dimension_numbers = #tpu.dot_dimension_numbers<[1], [0], [0], [1], [0, 0, 1, 1], [], []>} : vector<8x784xf32>, vector<784x16xf32>, vector<8x16xf32> -> vector<8x16xf32>
    %3 = math.cos %2 : vector<8x16xf32>
    %4 = math.sin %2 : vector<8x16xf32>
    %5 = tpu.iota {dimensions = array<i32: 1>} : vector<8x16xi32>
    %c3_i32 = arith.constant 3 : i32
    %6 = vector.broadcast %c3_i32 : i32 to vector<8x16xi32>
    %7 = arith.shrsi %5, %6 : vector<8x16xi32>
    %c1_i32 = arith.constant 1 : i32
    %8 = vector.broadcast %c1_i32 : i32 to vector<8x16xi32>
    %9 = arith.andi %7, %8 : vector<8x16xi32>
    %c1_i32_3 = arith.constant 1 : i32
    %10 = vector.broadcast %c1_i32_3 : i32 to vector<8x16xi32>
    %11 = arith.cmpi eq, %9, %10 : vector<8x16xi32>
    %c2_i32 = arith.constant 2 : i32
    %12 = vector.broadcast %c2_i32 : i32 to vector<8x16xi32>
    %13 = arith.shrsi %5, %12 : vector<8x16xi32>
    %c1_i32_4 = arith.constant 1 : i32
    %14 = vector.broadcast %c1_i32_4 : i32 to vector<8x16xi32>
    %15 = arith.andi %13, %14 : vector<8x16xi32>
    %c1_i32_5 = arith.constant 1 : i32
    %16 = vector.broadcast %c1_i32_5 : i32 to vector<8x16xi32>
    %17 = arith.cmpi eq, %15, %16 : vector<8x16xi32>
    %c1_i32_6 = arith.constant 1 : i32
    %18 = vector.broadcast %c1_i32_6 : i32 to vector<8x16xi32>
    %19 = arith.shrsi %5, %18 : vector<8x16xi32>
    %c1_i32_7 = arith.constant 1 : i32
    %20 = vector.broadcast %c1_i32_7 : i32 to vector<8x16xi32>
    %21 = arith.andi %19, %20 : vector<8x16xi32>
    %c1_i32_8 = arith.constant 1 : i32
    %22 = vector.broadcast %c1_i32_8 : i32 to vector<8x16xi32>
    %23 = arith.cmpi eq, %21, %22 : vector<8x16xi32>
    %c0_i32 = arith.constant 0 : i32
    %24 = vector.broadcast %c0_i32 : i32 to vector<8x16xi32>
    %25 = arith.shrsi %5, %24 : vector<8x16xi32>
    %c1_i32_9 = arith.constant 1 : i32
    %26 = vector.broadcast %c1_i32_9 : i32 to vector<8x16xi32>
    %27 = arith.andi %25, %26 : vector<8x16xi32>
    %c1_i32_10 = arith.constant 1 : i32
    %28 = vector.broadcast %c1_i32_10 : i32 to vector<8x16xi32>
    %29 = arith.cmpi eq, %27, %28 : vector<8x16xi32>
    %30 = vector.extract_strided_slice %4 {offsets = [0, 0], sizes = [8, 1], strides = [1, 1]} : vector<8x16xf32> to vector<8x1xf32>
    %31 = vector.extract_strided_slice %3 {offsets = [0, 0], sizes = [8, 1], strides = [1, 1]} : vector<8x16xf32> to vector<8x1xf32>
    %32 = vector.shape_cast %30 : vector<8x1xf32> to vector<8x1xf32>
    %33 = vector.broadcast %32 : vector<8x1xf32> to vector<8x16xf32>
    %34 = vector.shape_cast %31 : vector<8x1xf32> to vector<8x1xf32>
    %35 = vector.broadcast %34 : vector<8x1xf32> to vector<8x16xf32>
    %36 = arith.select %11, %33, %35 : vector<8x16xi1>, vector<8x16xf32>
    %37 = vector.extract_strided_slice %4 {offsets = [0, 1], sizes = [8, 1], strides = [1, 1]} : vector<8x16xf32> to vector<8x1xf32>
    %38 = vector.extract_strided_slice %3 {offsets = [0, 1], sizes = [8, 1], strides = [1, 1]} : vector<8x16xf32> to vector<8x1xf32>
    %39 = vector.shape_cast %37 : vector<8x1xf32> to vector<8x1xf32>
    %40 = vector.broadcast %39 : vector<8x1xf32> to vector<8x16xf32>
    %41 = vector.shape_cast %38 : vector<8x1xf32> to vector<8x1xf32>
    %42 = vector.broadcast %41 : vector<8x1xf32> to vector<8x16xf32>
    %43 = arith.select %17, %40, %42 : vector<8x16xi1>, vector<8x16xf32>
    %44 = arith.mulf %36, %43 : vector<8x16xf32>
    %45 = vector.extract_strided_slice %4 {offsets = [0, 2], sizes = [8, 1], strides = [1, 1]} : vector<8x16xf32> to vector<8x1xf32>
    %46 = vector.extract_strided_slice %3 {offsets = [0, 2], sizes = [8, 1], strides = [1, 1]} : vector<8x16xf32> to vector<8x1xf32>
    %47 = vector.shape_cast %45 : vector<8x1xf32> to vector<8x1xf32>
    %48 = vector.broadcast %47 : vector<8x1xf32> to vector<8x16xf32>
    %49 = vector.shape_cast %46 : vector<8x1xf32> to vector<8x1xf32>
    %50 = vector.broadcast %49 : vector<8x1xf32> to vector<8x16xf32>
    %51 = arith.select %23, %48, %50 : vector<8x16xi1>, vector<8x16xf32>
    %52 = arith.mulf %44, %51 : vector<8x16xf32>
    %53 = vector.extract_strided_slice %4 {offsets = [0, 3], sizes = [8, 1], strides = [1, 1]} : vector<8x16xf32> to vector<8x1xf32>
    %54 = vector.extract_strided_slice %3 {offsets = [0, 3], sizes = [8, 1], strides = [1, 1]} : vector<8x16xf32> to vector<8x1xf32>
    %55 = vector.shape_cast %53 : vector<8x1xf32> to vector<8x1xf32>
    %56 = vector.broadcast %55 : vector<8x1xf32> to vector<8x16xf32>
    %57 = vector.shape_cast %54 : vector<8x1xf32> to vector<8x1xf32>
    %58 = vector.broadcast %57 : vector<8x1xf32> to vector<8x16xf32>
    %59 = arith.select %29, %56, %58 : vector<8x16xi1>, vector<8x16xf32>
    %60 = arith.mulf %52, %59 : vector<8x16xf32>
    %61 = vector.extract_strided_slice %4 {offsets = [0, 4], sizes = [8, 1], strides = [1, 1]} : vector<8x16xf32> to vector<8x1xf32>
    %62 = vector.extract_strided_slice %3 {offsets = [0, 4], sizes = [8, 1], strides = [1, 1]} : vector<8x16xf32> to vector<8x1xf32>
    %63 = vector.shape_cast %61 : vector<8x1xf32> to vector<8x1xf32>
    %64 = vector.broadcast %63 : vector<8x1xf32> to vector<8x16xf32>
    %65 = vector.shape_cast %62 : vector<8x1xf32> to vector<8x1xf32>
    %66 = vector.broadcast %65 : vector<8x1xf32> to vector<8x16xf32>
    %67 = arith.select %11, %64, %66 : vector<8x16xi1>, vector<8x16xf32>
    %68 = vector.extract_strided_slice %4 {offsets = [0, 5], sizes = [8, 1], strides = [1, 1]} : vector<8x16xf32> to vector<8x1xf32>
    %69 = vector.extract_strided_slice %3 {offsets = [0, 5], sizes = [8, 1], strides = [1, 1]} : vector<8x16xf32> to vector<8x1xf32>
    %70 = vector.shape_cast %68 : vector<8x1xf32> to vector<8x1xf32>
    %71 = vector.broadcast %70 : vector<8x1xf32> to vector<8x16xf32>
    %72 = vector.shape_cast %69 : vector<8x1xf32> to vector<8x1xf32>
    %73 = vector.broadcast %72 : vector<8x1xf32> to vector<8x16xf32>
    %74 = arith.select %17, %71, %73 : vector<8x16xi1>, vector<8x16xf32>
    %75 = arith.mulf %67, %74 : vector<8x16xf32>
    %76 = vector.extract_strided_slice %4 {offsets = [0, 6], sizes = [8, 1], strides = [1, 1]} : vector<8x16xf32> to vector<8x1xf32>
    %77 = vector.extract_strided_slice %3 {offsets = [0, 6], sizes = [8, 1], strides = [1, 1]} : vector<8x16xf32> to vector<8x1xf32>
    %78 = vector.shape_cast %76 : vector<8x1xf32> to vector<8x1xf32>
    %79 = vector.broadcast %78 : vector<8x1xf32> to vector<8x16xf32>
    %80 = vector.shape_cast %77 : vector<8x1xf32> to vector<8x1xf32>
    %81 = vector.broadcast %80 : vector<8x1xf32> to vector<8x16xf32>
    %82 = arith.select %23, %79, %81 : vector<8x16xi1>, vector<8x16xf32>
    %83 = arith.mulf %75, %82 : vector<8x16xf32>
    %84 = vector.extract_strided_slice %4 {offsets = [0, 7], sizes = [8, 1], strides = [1, 1]} : vector<8x16xf32> to vector<8x1xf32>
    %85 = vector.extract_strided_slice %3 {offsets = [0, 7], sizes = [8, 1], strides = [1, 1]} : vector<8x16xf32> to vector<8x1xf32>
    %86 = vector.shape_cast %84 : vector<8x1xf32> to vector<8x1xf32>
    %87 = vector.broadcast %86 : vector<8x1xf32> to vector<8x16xf32>
    %88 = vector.shape_cast %85 : vector<8x1xf32> to vector<8x1xf32>
    %89 = vector.broadcast %88 : vector<8x1xf32> to vector<8x16xf32>
    %90 = arith.select %29, %87, %89 : vector<8x16xi1>, vector<8x16xf32>
    %91 = arith.mulf %83, %90 : vector<8x16xf32>
    %92 = vector.extract_strided_slice %4 {offsets = [0, 8], sizes = [8, 1], strides = [1, 1]} : vector<8x16xf32> to vector<8x1xf32>
    %93 = vector.extract_strided_slice %3 {offsets = [0, 8], sizes = [8, 1], strides = [1, 1]} : vector<8x16xf32> to vector<8x1xf32>
    %94 = vector.shape_cast %92 : vector<8x1xf32> to vector<8x1xf32>
    %95 = vector.broadcast %94 : vector<8x1xf32> to vector<8x16xf32>
    %96 = vector.shape_cast %93 : vector<8x1xf32> to vector<8x1xf32>
    %97 = vector.broadcast %96 : vector<8x1xf32> to vector<8x16xf32>
    %98 = arith.select %11, %95, %97 : vector<8x16xi1>, vector<8x16xf32>
    %99 = vector.extract_strided_slice %4 {offsets = [0, 9], sizes = [8, 1], strides = [1, 1]} : vector<8x16xf32> to vector<8x1xf32>
    %100 = vector.extract_strided_slice %3 {offsets = [0, 9], sizes = [8, 1], strides = [1, 1]} : vector<8x16xf32> to vector<8x1xf32>
    %101 = vector.shape_cast %99 : vector<8x1xf32> to vector<8x1xf32>
    %102 = vector.broadcast %101 : vector<8x1xf32> to vector<8x16xf32>
    %103 = vector.shape_cast %100 : vector<8x1xf32> to vector<8x1xf32>
    %104 = vector.broadcast %103 : vector<8x1xf32> to vector<8x16xf32>
    %105 = arith.select %17, %102, %104 : vector<8x16xi1>, vector<8x16xf32>
    %106 = arith.mulf %98, %105 : vector<8x16xf32>
    %107 = vector.extract_strided_slice %4 {offsets = [0, 10], sizes = [8, 1], strides = [1, 1]} : vector<8x16xf32> to vector<8x1xf32>
    %108 = vector.extract_strided_slice %3 {offsets = [0, 10], sizes = [8, 1], strides = [1, 1]} : vector<8x16xf32> to vector<8x1xf32>
    %109 = vector.shape_cast %107 : vector<8x1xf32> to vector<8x1xf32>
    %110 = vector.broadcast %109 : vector<8x1xf32> to vector<8x16xf32>
    %111 = vector.shape_cast %108 : vector<8x1xf32> to vector<8x1xf32>
    %112 = vector.broadcast %111 : vector<8x1xf32> to vector<8x16xf32>
    %113 = arith.select %23, %110, %112 : vector<8x16xi1>, vector<8x16xf32>
    %114 = arith.mulf %106, %113 : vector<8x16xf32>
    %115 = vector.extract_strided_slice %4 {offsets = [0, 11], sizes = [8, 1], strides = [1, 1]} : vector<8x16xf32> to vector<8x1xf32>
    %116 = vector.extract_strided_slice %3 {offsets = [0, 11], sizes = [8, 1], strides = [1, 1]} : vector<8x16xf32> to vector<8x1xf32>
    %117 = vector.shape_cast %115 : vector<8x1xf32> to vector<8x1xf32>
    %118 = vector.broadcast %117 : vector<8x1xf32> to vector<8x16xf32>
    %119 = vector.shape_cast %116 : vector<8x1xf32> to vector<8x1xf32>
    %120 = vector.broadcast %119 : vector<8x1xf32> to vector<8x16xf32>
    %121 = arith.select %29, %118, %120 : vector<8x16xi1>, vector<8x16xf32>
    %122 = arith.mulf %114, %121 : vector<8x16xf32>
    %123 = vector.extract_strided_slice %4 {offsets = [0, 12], sizes = [8, 1], strides = [1, 1]} : vector<8x16xf32> to vector<8x1xf32>
    %124 = vector.extract_strided_slice %3 {offsets = [0, 12], sizes = [8, 1], strides = [1, 1]} : vector<8x16xf32> to vector<8x1xf32>
    %125 = vector.shape_cast %123 : vector<8x1xf32> to vector<8x1xf32>
    %126 = vector.broadcast %125 : vector<8x1xf32> to vector<8x16xf32>
    %127 = vector.shape_cast %124 : vector<8x1xf32> to vector<8x1xf32>
    %128 = vector.broadcast %127 : vector<8x1xf32> to vector<8x16xf32>
    %129 = arith.select %11, %126, %128 : vector<8x16xi1>, vector<8x16xf32>
    %130 = vector.extract_strided_slice %4 {offsets = [0, 13], sizes = [8, 1], strides = [1, 1]} : vector<8x16xf32> to vector<8x1xf32>
    %131 = vector.extract_strided_slice %3 {offsets = [0, 13], sizes = [8, 1], strides = [1, 1]} : vector<8x16xf32> to vector<8x1xf32>
    %132 = vector.shape_cast %130 : vector<8x1xf32> to vector<8x1xf32>
    %133 = vector.broadcast %132 : vector<8x1xf32> to vector<8x16xf32>
    %134 = vector.shape_cast %131 : vector<8x1xf32> to vector<8x1xf32>
    %135 = vector.broadcast %134 : vector<8x1xf32> to vector<8x16xf32>
    %136 = arith.select %17, %133, %135 : vector<8x16xi1>, vector<8x16xf32>
    %137 = arith.mulf %129, %136 : vector<8x16xf32>
    %138 = vector.extract_strided_slice %4 {offsets = [0, 14], sizes = [8, 1], strides = [1, 1]} : vector<8x16xf32> to vector<8x1xf32>
    %139 = vector.extract_strided_slice %3 {offsets = [0, 14], sizes = [8, 1], strides = [1, 1]} : vector<8x16xf32> to vector<8x1xf32>
    %140 = vector.shape_cast %138 : vector<8x1xf32> to vector<8x1xf32>
    %141 = vector.broadcast %140 : vector<8x1xf32> to vector<8x16xf32>
    %142 = vector.shape_cast %139 : vector<8x1xf32> to vector<8x1xf32>
    %143 = vector.broadcast %142 : vector<8x1xf32> to vector<8x16xf32>
    %144 = arith.select %23, %141, %143 : vector<8x16xi1>, vector<8x16xf32>
    %145 = arith.mulf %137, %144 : vector<8x16xf32>
    %146 = vector.extract_strided_slice %4 {offsets = [0, 15], sizes = [8, 1], strides = [1, 1]} : vector<8x16xf32> to vector<8x1xf32>
    %147 = vector.extract_strided_slice %3 {offsets = [0, 15], sizes = [8, 1], strides = [1, 1]} : vector<8x16xf32> to vector<8x1xf32>
    %148 = vector.shape_cast %146 : vector<8x1xf32> to vector<8x1xf32>
    %149 = vector.broadcast %148 : vector<8x1xf32> to vector<8x16xf32>
    %150 = vector.shape_cast %147 : vector<8x1xf32> to vector<8x1xf32>
    %151 = vector.broadcast %150 : vector<8x1xf32> to vector<8x16xf32>
    %152 = arith.select %29, %149, %151 : vector<8x16xi1>, vector<8x16xf32>
    %153 = arith.mulf %145, %152 : vector<8x16xf32>
    %154 = tpu.concatenate %60, %91, %122, %153 in 1 : vector<8x16xf32>, vector<8x16xf32>, vector<8x16xf32>, vector<8x16xf32> -> vector<8x64xf32>
    %c0_11 = arith.constant 0 : index
    %c0_12 = arith.constant 0 : index
    %155 = vector.load %arg3[%c0_11, %c0_12] : memref<64x128xf32, #tpu.memory_space<vmem>>, vector<64x128xf32>
    %cst_13 = arith.constant dense<0.000000e+00> : vector<8x128xf32>
    %156 = tpu.matmul %154, %155, %cst_13 {dimension_numbers = #tpu.dot_dimension_numbers<[1], [0], [0], [1], [0, 0, 1, 1], [], []>} : vector<8x64xf32>, vector<64x128xf32>, vector<8x128xf32> -> vector<8x128xf32>
    %157 = arith.mulf %156, %156 : vector<8x128xf32>
    %c0_14 = arith.constant 0 : index
    %c0_15 = arith.constant 0 : index
    %158 = vector.load %arg4[%c0_14, %c0_15] : memref<128x16xf32, #tpu.memory_space<vmem>>, vector<128x16xf32>
    %cst_16 = arith.constant dense<0.000000e+00> : vector<8x16xf32>
    %159 = tpu.matmul %157, %158, %cst_16 {dimension_numbers = #tpu.dot_dimension_numbers<[1], [0], [0], [1], [0, 0, 1, 1], [], []>} : vector<8x128xf32>, vector<128x16xf32>, vector<8x16xf32> -> vector<8x16xf32>
    %160 = math.cos %159 : vector<8x16xf32>
    %161 = math.sin %159 : vector<8x16xf32>
    %162 = vector.extract_strided_slice %160 {offsets = [0, 0], sizes = [8, 4], strides = [1, 1]} : vector<8x16xf32> to vector<8x4xf32>
    %163 = vector.extract_strided_slice %161 {offsets = [0, 0], sizes = [8, 4], strides = [1, 1]} : vector<8x16xf32> to vector<8x4xf32>
    %164 = vector.extract_strided_slice %160 {offsets = [0, 4], sizes = [8, 4], strides = [1, 1]} : vector<8x16xf32> to vector<8x4xf32>
    %165 = vector.extract_strided_slice %161 {offsets = [0, 4], sizes = [8, 4], strides = [1, 1]} : vector<8x16xf32> to vector<8x4xf32>
    %166 = vector.extract_strided_slice %160 {offsets = [0, 8], sizes = [8, 4], strides = [1, 1]} : vector<8x16xf32> to vector<8x4xf32>
    %167 = vector.extract_strided_slice %161 {offsets = [0, 8], sizes = [8, 4], strides = [1, 1]} : vector<8x16xf32> to vector<8x4xf32>
    %168 = vector.extract_strided_slice %160 {offsets = [0, 12], sizes = [8, 4], strides = [1, 1]} : vector<8x16xf32> to vector<8x4xf32>
    %169 = vector.extract_strided_slice %161 {offsets = [0, 12], sizes = [8, 4], strides = [1, 1]} : vector<8x16xf32> to vector<8x4xf32>
    %170 = arith.mulf %162, %164 : vector<8x4xf32>
    %cst_17 = arith.constant 0.000000e+00 : f32
    %171 = vector.broadcast %cst_17 : f32 to vector<8x4xf32>
    %172 = arith.subf %171, %162 : vector<8x4xf32>
    %173 = arith.mulf %172, %165 : vector<8x4xf32>
    %174 = arith.mulf %163, %164 : vector<8x4xf32>
    %175 = arith.mulf %163, %165 : vector<8x4xf32>
    %176 = arith.mulf %166, %170 : vector<8x4xf32>
    %177 = arith.mulf %167, %175 : vector<8x4xf32>
    %178 = arith.addf %176, %177 : vector<8x4xf32>
    %179 = arith.mulf %166, %173 : vector<8x4xf32>
    %180 = arith.mulf %167, %174 : vector<8x4xf32>
    %181 = arith.subf %179, %180 : vector<8x4xf32>
    %182 = arith.mulf %167, %173 : vector<8x4xf32>
    %183 = arith.mulf %166, %174 : vector<8x4xf32>
    %184 = arith.addf %182, %183 : vector<8x4xf32>
    %cst_18 = arith.constant 0.000000e+00 : f32
    %185 = vector.broadcast %cst_18 : f32 to vector<8x4xf32>
    %186 = arith.subf %185, %167 : vector<8x4xf32>
    %187 = arith.mulf %186, %170 : vector<8x4xf32>
    %188 = arith.mulf %166, %175 : vector<8x4xf32>
    %189 = arith.addf %187, %188 : vector<8x4xf32>
    %190 = arith.mulf %168, %178 : vector<8x4xf32>
    %191 = arith.mulf %169, %184 : vector<8x4xf32>
    %192 = arith.subf %190, %191 : vector<8x4xf32>
    %193 = arith.mulf %168, %181 : vector<8x4xf32>
    %194 = arith.mulf %169, %189 : vector<8x4xf32>
    %195 = arith.subf %193, %194 : vector<8x4xf32>
    %196 = arith.mulf %169, %178 : vector<8x4xf32>
    %197 = arith.mulf %168, %184 : vector<8x4xf32>
    %198 = arith.addf %196, %197 : vector<8x4xf32>
    %199 = arith.mulf %169, %181 : vector<8x4xf32>
    %200 = arith.mulf %168, %189 : vector<8x4xf32>
    %201 = arith.addf %199, %200 : vector<8x4xf32>
    %202 = vector.extract_strided_slice %198 {offsets = [0, 0], sizes = [8, 1], strides = [1, 1]} : vector<8x4xf32> to vector<8x1xf32>
    %203 = vector.extract_strided_slice %192 {offsets = [0, 0], sizes = [8, 1], strides = [1, 1]} : vector<8x4xf32> to vector<8x1xf32>
    %204 = vector.shape_cast %202 : vector<8x1xf32> to vector<8x1xf32>
    %205 = vector.broadcast %204 : vector<8x1xf32> to vector<8x16xf32>
    %206 = vector.shape_cast %203 : vector<8x1xf32> to vector<8x1xf32>
    %207 = vector.broadcast %206 : vector<8x1xf32> to vector<8x16xf32>
    %208 = arith.select %11, %205, %207 : vector<8x16xi1>, vector<8x16xf32>
    %209 = vector.extract_strided_slice %201 {offsets = [0, 0], sizes = [8, 1], strides = [1, 1]} : vector<8x4xf32> to vector<8x1xf32>
    %210 = vector.extract_strided_slice %195 {offsets = [0, 0], sizes = [8, 1], strides = [1, 1]} : vector<8x4xf32> to vector<8x1xf32>
    %211 = vector.shape_cast %209 : vector<8x1xf32> to vector<8x1xf32>
    %212 = vector.broadcast %211 : vector<8x1xf32> to vector<8x16xf32>
    %213 = vector.shape_cast %210 : vector<8x1xf32> to vector<8x1xf32>
    %214 = vector.broadcast %213 : vector<8x1xf32> to vector<8x16xf32>
    %215 = arith.select %11, %212, %214 : vector<8x16xi1>, vector<8x16xf32>
    %216 = vector.extract_strided_slice %198 {offsets = [0, 1], sizes = [8, 1], strides = [1, 1]} : vector<8x4xf32> to vector<8x1xf32>
    %217 = vector.extract_strided_slice %192 {offsets = [0, 1], sizes = [8, 1], strides = [1, 1]} : vector<8x4xf32> to vector<8x1xf32>
    %218 = vector.shape_cast %216 : vector<8x1xf32> to vector<8x1xf32>
    %219 = vector.broadcast %218 : vector<8x1xf32> to vector<8x16xf32>
    %220 = vector.shape_cast %217 : vector<8x1xf32> to vector<8x1xf32>
    %221 = vector.broadcast %220 : vector<8x1xf32> to vector<8x16xf32>
    %222 = arith.select %17, %219, %221 : vector<8x16xi1>, vector<8x16xf32>
    %223 = vector.extract_strided_slice %201 {offsets = [0, 1], sizes = [8, 1], strides = [1, 1]} : vector<8x4xf32> to vector<8x1xf32>
    %224 = vector.extract_strided_slice %195 {offsets = [0, 1], sizes = [8, 1], strides = [1, 1]} : vector<8x4xf32> to vector<8x1xf32>
    %225 = vector.shape_cast %223 : vector<8x1xf32> to vector<8x1xf32>
    %226 = vector.broadcast %225 : vector<8x1xf32> to vector<8x16xf32>
    %227 = vector.shape_cast %224 : vector<8x1xf32> to vector<8x1xf32>
    %228 = vector.broadcast %227 : vector<8x1xf32> to vector<8x16xf32>
    %229 = arith.select %17, %226, %228 : vector<8x16xi1>, vector<8x16xf32>
    %230 = arith.mulf %208, %222 : vector<8x16xf32>
    %231 = arith.mulf %215, %229 : vector<8x16xf32>
    %232 = arith.subf %230, %231 : vector<8x16xf32>
    %233 = arith.mulf %208, %229 : vector<8x16xf32>
    %234 = arith.mulf %215, %222 : vector<8x16xf32>
    %235 = arith.addf %233, %234 : vector<8x16xf32>
    %236 = vector.extract_strided_slice %198 {offsets = [0, 2], sizes = [8, 1], strides = [1, 1]} : vector<8x4xf32> to vector<8x1xf32>
    %237 = vector.extract_strided_slice %192 {offsets = [0, 2], sizes = [8, 1], strides = [1, 1]} : vector<8x4xf32> to vector<8x1xf32>
    %238 = vector.shape_cast %236 : vector<8x1xf32> to vector<8x1xf32>
    %239 = vector.broadcast %238 : vector<8x1xf32> to vector<8x16xf32>
    %240 = vector.shape_cast %237 : vector<8x1xf32> to vector<8x1xf32>
    %241 = vector.broadcast %240 : vector<8x1xf32> to vector<8x16xf32>
    %242 = arith.select %23, %239, %241 : vector<8x16xi1>, vector<8x16xf32>
    %243 = vector.extract_strided_slice %201 {offsets = [0, 2], sizes = [8, 1], strides = [1, 1]} : vector<8x4xf32> to vector<8x1xf32>
    %244 = vector.extract_strided_slice %195 {offsets = [0, 2], sizes = [8, 1], strides = [1, 1]} : vector<8x4xf32> to vector<8x1xf32>
    %245 = vector.shape_cast %243 : vector<8x1xf32> to vector<8x1xf32>
    %246 = vector.broadcast %245 : vector<8x1xf32> to vector<8x16xf32>
    %247 = vector.shape_cast %244 : vector<8x1xf32> to vector<8x1xf32>
    %248 = vector.broadcast %247 : vector<8x1xf32> to vector<8x16xf32>
    %249 = arith.select %23, %246, %248 : vector<8x16xi1>, vector<8x16xf32>
    %250 = arith.mulf %232, %242 : vector<8x16xf32>
    %251 = arith.mulf %235, %249 : vector<8x16xf32>
    %252 = arith.subf %250, %251 : vector<8x16xf32>
    %253 = arith.mulf %232, %249 : vector<8x16xf32>
    %254 = arith.mulf %235, %242 : vector<8x16xf32>
    %255 = arith.addf %253, %254 : vector<8x16xf32>
    %256 = vector.extract_strided_slice %198 {offsets = [0, 3], sizes = [8, 1], strides = [1, 1]} : vector<8x4xf32> to vector<8x1xf32>
    %257 = vector.extract_strided_slice %192 {offsets = [0, 3], sizes = [8, 1], strides = [1, 1]} : vector<8x4xf32> to vector<8x1xf32>
    %258 = vector.shape_cast %256 : vector<8x1xf32> to vector<8x1xf32>
    %259 = vector.broadcast %258 : vector<8x1xf32> to vector<8x16xf32>
    %260 = vector.shape_cast %257 : vector<8x1xf32> to vector<8x1xf32>
    %261 = vector.broadcast %260 : vector<8x1xf32> to vector<8x16xf32>
    %262 = arith.select %29, %259, %261 : vector<8x16xi1>, vector<8x16xf32>
    %263 = vector.extract_strided_slice %201 {offsets = [0, 3], sizes = [8, 1], strides = [1, 1]} : vector<8x4xf32> to vector<8x1xf32>
    %264 = vector.extract_strided_slice %195 {offsets = [0, 3], sizes = [8, 1], strides = [1, 1]} : vector<8x4xf32> to vector<8x1xf32>
    %265 = vector.shape_cast %263 : vector<8x1xf32> to vector<8x1xf32>
    %266 = vector.broadcast %265 : vector<8x1xf32> to vector<8x16xf32>
    %267 = vector.shape_cast %264 : vector<8x1xf32> to vector<8x1xf32>
    %268 = vector.broadcast %267 : vector<8x1xf32> to vector<8x16xf32>
    %269 = arith.select %29, %266, %268 : vector<8x16xi1>, vector<8x16xf32>
    %270 = arith.mulf %252, %262 : vector<8x16xf32>
    %271 = arith.mulf %255, %269 : vector<8x16xf32>
    %272 = arith.subf %270, %271 : vector<8x16xf32>
    %273 = arith.mulf %252, %269 : vector<8x16xf32>
    %274 = arith.mulf %255, %262 : vector<8x16xf32>
    %275 = arith.addf %273, %274 : vector<8x16xf32>
    %276 = tpu.concatenate %272, %275 in 1 : vector<8x16xf32>, vector<8x16xf32> -> vector<8x32xf32>
    %c0_19 = arith.constant 0 : index
    %c0_20 = arith.constant 0 : index
    %277 = vector.load %arg5[%c0_19, %c0_20] : memref<32x32xf32, #tpu.memory_space<vmem>>, vector<32x32xf32>
    %cst_21 = arith.constant dense<0.000000e+00> : vector<8x32xf32>
    %278 = tpu.matmul %276, %277, %cst_21 {dimension_numbers = #tpu.dot_dimension_numbers<[1], [0], [0], [1], [0, 0, 1, 1], [], []>} : vector<8x32xf32>, vector<32x32xf32>, vector<8x32xf32> -> vector<8x32xf32>
    %279 = arith.mulf %278, %278 : vector<8x32xf32>
    %c0_22 = arith.constant 0 : index
    %c0_23 = arith.constant 0 : index
    %280 = vector.load %arg6[%c0_22, %c0_23] : memref<32x4xf32, #tpu.memory_space<vmem>>, vector<32x4xf32>
    %cst_24 = arith.constant dense<0.000000e+00> : vector<8x4xf32>
    %281 = tpu.matmul %279, %280, %cst_24 {dimension_numbers = #tpu.dot_dimension_numbers<[1], [0], [0], [1], [0, 0, 1, 1], [], []>} : vector<8x32xf32>, vector<32x4xf32>, vector<8x4xf32> -> vector<8x4xf32>
    %cst_25 = arith.constant dense<0xFF800000> : vector<8xf32>
    %282 = vector.multi_reduction <maximumf>, %281, %cst_25 [1] : vector<8x4xf32> to vector<8xf32>
    %283 = vector.shape_cast %282 : vector<8xf32> to vector<8x1xf32>
    %284 = vector.broadcast %283 : vector<8x1xf32> to vector<8x4xf32>
    %285 = arith.subf %281, %284 : vector<8x4xf32>
    %286 = math.exp %285 : vector<8x4xf32>
    %cst_26 = arith.constant dense<0.000000e+00> : vector<8xf32>
    %287 = vector.multi_reduction <add>, %286, %cst_26 [1] : vector<8x4xf32> to vector<8xf32>
    %288 = vector.shape_cast %287 : vector<8xf32> to vector<8x1xf32>
    %289 = math.log %288 : vector<8x1xf32>
    %290 = arith.addf %289, %283 : vector<8x1xf32>
    %291 = vector.broadcast %290 : vector<8x1xf32> to vector<8x4xf32>
    %292 = arith.subf %281, %291 : vector<8x4xf32>
    %c0_27 = arith.constant 0 : index
    %c0_28 = arith.constant 0 : index
    %293 = vector.load %arg7[%c0_27, %c0_28] : memref<8x4xf32, #tpu.memory_space<vmem>>, vector<8x4xf32>
    tpu.vector_store %arg7[%c0_27, %c0_28], %292 {strides = array<i32>} : memref<8x4xf32, #tpu.memory_space<vmem>>, vector<8x4xf32>,
    return
  }
  func.func @transform_0(%arg0: i32) -> (i32, i32) {
    %c0_i32 = arith.constant 0 : i32
    %c0_i32_0 = arith.constant 0 : i32
    return %arg0, %c0_i32 : i32, i32
  }
  func.func @transform_1(%arg0: i32) -> (i32, i32) {
    %c0_i32 = arith.constant 0 : i32
    %c0_i32_0 = arith.constant 0 : i32
    %c0_i32_1 = arith.constant 0 : i32
    return %c0_i32, %c0_i32_0 : i32, i32
  }
  func.func @transform_2(%arg0: i32) -> (i32, i32) {
    %c0_i32 = arith.constant 0 : i32
    %c0_i32_0 = arith.constant 0 : i32
    %c0_i32_1 = arith.constant 0 : i32
    return %c0_i32, %c0_i32_0 : i32, i32
  }
  func.func @transform_3(%arg0: i32) -> (i32, i32) {
    %c0_i32 = arith.constant 0 : i32
    %c0_i32_0 = arith.constant 0 : i32
    %c0_i32_1 = arith.constant 0 : i32
    return %c0_i32, %c0_i32_0 : i32, i32
  }
  func.func @transform_4(%arg0: i32) -> (i32, i32) {
    %c0_i32 = arith.constant 0 : i32
    %c0_i32_0 = arith.constant 0 : i32
    %c0_i32_1 = arith.constant 0 : i32
    return %c0_i32, %c0_i32_0 : i32, i32
  }
  func.func @transform_5(%arg0: i32) -> (i32, i32) {
    %c0_i32 = arith.constant 0 : i32
    %c0_i32_0 = arith.constant 0 : i32
    %c0_i32_1 = arith.constant 0 : i32
    return %c0_i32, %c0_i32_0 : i32, i32
  }
  func.func @transform_6(%arg0: i32) -> (i32, i32) {
    %c0_i32 = arith.constant 0 : i32
    %c0_i32_0 = arith.constant 0 : i32
    return %arg0, %c0_i32 : i32, i32
  }
}

</mosaic_0001>

<llo_original>
// kernel: tpu_custom_call.1
$region0: #{tpu_custom_call.1}
  #allocation0 [shape = 'u32[]', space=smem, size = 0x4, offset = 0x4, fixed_abs, tag = 'smem constant byte address 0x4 - core index']
  #allocation1 [shape = 'u32[144,128]{1,0:T(1,128)}', space=vmem, size = 0x12000, scoped, tag = 'internal scratch']
  %s0 = inlined_call_operand.vmem [shape: f32[8,784], index: 0, kind: input, shape index: {}]
  %s1 = inlined_call_operand.vmem [shape: f32[784,16], index: 1, kind: input, shape index: {}]
  %s2 = inlined_call_operand.vmem [shape: f32[64,128], index: 2, kind: input, shape index: {}]
  %s3 = inlined_call_operand.vmem [shape: f32[128,16], index: 3, kind: input, shape index: {}]
  %s4 = inlined_call_operand.vmem [shape: f32[32,32], index: 4, kind: input, shape index: {}]
  %s5 = inlined_call_operand.vmem [shape: f32[32,4], index: 5, kind: input, shape index: {}]
  %s6 = inlined_call_operand.vmem [shape: f32[8,4], index: 6, kind: output, shape index: {}]
  %s7 = sld [smem:[#allocation0]]
  $region34: #{tpu_custom_call.1} parent=0
    _
  %s9 = ssub.s32 1, %s7
  %s10 = scalar_select 0, %s9, %s7
  // Predicated region
  $region2: #{tpu_custom_call.1} parent=0 // pred_check
    _
  $region3: #{tpu_custom_call.1} parent=0 // pred_check_branch
    %12 = sbr.rel (0) target = $region5
  $region4: #{tpu_custom_call.1} parent=0 // pred_region
    _
  $region5: #{tpu_custom_call.1} parent=0 // pred_fallthru
    _
  // Predicated region
  $region6: #{tpu_custom_call.1} parent=0 // pred_check
    _
  $region7: #{tpu_custom_call.1} parent=0 // pred_check_branch
    %14 = sbr.rel (0) target = $region9
  $region8: #{tpu_custom_call.1} parent=0 // pred_region
    _
  $region9: #{tpu_custom_call.1} parent=0 // pred_fallthru
    _
  // Predicated region
  $region10: #{tpu_custom_call.1} parent=0 // pred_check
    _
  $region11: #{tpu_custom_call.1} parent=0 // pred_check_branch
    %16 = sbr.rel (0) target = $region13
  $region12: #{tpu_custom_call.1} parent=0 // pred_region
    _
  $region13: #{tpu_custom_call.1} parent=0 // pred_fallthru
    _
  // Predicated region
  $region14: #{tpu_custom_call.1} parent=0 // pred_check
    _
  $region15: #{tpu_custom_call.1} parent=0 // pred_check_branch
    %18 = sbr.rel (0) target = $region17
  $region16: #{tpu_custom_call.1} parent=0 // pred_region
    _
  $region17: #{tpu_custom_call.1} parent=0 // pred_fallthru
    _
  // Predicated region
  $region18: #{tpu_custom_call.1} parent=0 // pred_check
    _
  $region19: #{tpu_custom_call.1} parent=0 // pred_check_branch
    %20 = sbr.rel (0) target = $region21
  $region20: #{tpu_custom_call.1} parent=0 // pred_region
    _
  $region21: #{tpu_custom_call.1} parent=0 // pred_fallthru
    _
  // Predicated region
  $region22: #{tpu_custom_call.1} parent=0 // pred_check
    _
  $region23: #{tpu_custom_call.1} parent=0 // pred_check_branch
    %22 = sbr.rel (0) target = $region25
  $region24: #{tpu_custom_call.1} parent=0 // pred_region
    _
  $region25: #{tpu_custom_call.1} parent=0 // pred_fallthru
    _
  %v23 = vld [vmem:[%s0] sm:$0xff]
  %v24 = vld [vmem:[%s0 + $0x8] sm:$0xff]
  %v25 = vld [vmem:[%s0 + $0x10] sm:$0xff]
  %v26 = vld [vmem:[%s0 + $0x18] sm:$0xff]
  %v27 = vld [vmem:[%s0 + $0x20] sm:$0xff]
  %v28 = vld [vmem:[%s0 + $0x28] sm:$0xff]
  %v29 = vld [vmem:[%s0 + $0x30] sm:$0xff]
  %v30 = vld [vmem:[%s1] sm:$0xff]
  %v31 = vld [vmem:[%s1 + $0x8] sm:$0xff]
  %v32 = vld [vmem:[%s1 + $0x10] sm:$0xff]
  %v33 = vld [vmem:[%s1 + $0x18] sm:$0xff]
  %v34 = vld [vmem:[%s1 + $0x20] sm:$0xff]
  %v35 = vld [vmem:[%s1 + $0x28] sm:$0xff]
  %v36 = vld [vmem:[%s1 + $0x30] sm:$0xff]
  %v37 = vld [vmem:[%s1 + $0x38] sm:$0xff]
  %v38 = vld [vmem:[%s1 + $0x40] sm:$0xff]
  %v39 = vld [vmem:[%s1 + $0x48] sm:$0xff]
  %v40 = vld [vmem:[%s1 + $0x50] sm:$0xff]
  %v41 = vld [vmem:[%s1 + $0x58] sm:$0xff]
  %v42 = vld [vmem:[%s1 + $0x60] sm:$0xff]
  %v43 = vld [vmem:[%s1 + $0x68] sm:$0xff]
  %v44 = vld [vmem:[%s1 + $0x70] sm:$0xff]
  %v45 = vld [vmem:[%s1 + $0x78] sm:$0xff]
  %v46 = vld [vmem:[%s1 + $0x80] sm:$0xff]
  %v47 = vld [vmem:[%s1 + $0x88] sm:$0xff]
  %v48 = vld [vmem:[%s1 + $0x90] sm:$0xff]
  %v49 = vld [vmem:[%s1 + $0x98] sm:$0xff]
  %v50 = vld [vmem:[%s1 + $0xa0] sm:$0xff]
  %v51 = vld [vmem:[%s1 + $0xa8] sm:$0xff]
  %v52 = vld [vmem:[%s1 + $0xb0] sm:$0xff]
  %v53 = vld [vmem:[%s1 + $0xb8] sm:$0xff]
  %v54 = vld [vmem:[%s1 + $0xc0] sm:$0xff]
  %v55 = vld [vmem:[%s1 + $0xc8] sm:$0xff]
  %v56 = vld [vmem:[%s1 + $0xd0] sm:$0xff]
  %v57 = vld [vmem:[%s1 + $0xd8] sm:$0xff]
  %v58 = vld [vmem:[%s1 + $0xe0] sm:$0xff]
  %v59 = vld [vmem:[%s1 + $0xe8] sm:$0xff]
  %v60 = vld [vmem:[%s1 + $0xf0] sm:$0xff]
  %v61 = vld [vmem:[%s1 + $0xf8] sm:$0xff]
  %v62 = vld [vmem:[%s1 + $0x100] sm:$0xff]
  %v63 = vld [vmem:[%s1 + $0x108] sm:$0xff]
  %v64 = vld [vmem:[%s1 + $0x110] sm:$0xff]
  %v65 = vld [vmem:[%s1 + $0x118] sm:$0xff]
  %v66 = vld [vmem:[%s1 + $0x120] sm:$0xff]
  %v67 = vld [vmem:[%s1 + $0x128] sm:$0xff]
  %v68 = vld [vmem:[%s1 + $0x130] sm:$0xff]
  %v69 = vld [vmem:[%s1 + $0x138] sm:$0xff]
  %v70 = vld [vmem:[%s1 + $0x140] sm:$0xff]
  %v71 = vld [vmem:[%s1 + $0x148] sm:$0xff]
  %v72 = vld [vmem:[%s1 + $0x150] sm:$0xff]
  %v73 = vld [vmem:[%s1 + $0x158] sm:$0xff]
  %v74 = vld [vmem:[%s1 + $0x160] sm:$0xff]
  %v75 = vld [vmem:[%s1 + $0x168] sm:$0xff]
  %v76 = vld [vmem:[%s1 + $0x170] sm:$0xff]
  %v77 = vld [vmem:[%s1 + $0x178] sm:$0xff]
  %v78 = vld [vmem:[%s1 + $0x180] sm:$0xff]
  %v79 = vld [vmem:[%s1 + $0x188] sm:$0xff]
  %v80 = vld [vmem:[%s1 + $0x190] sm:$0xff]
  %v81 = vld [vmem:[%s1 + $0x198] sm:$0xff]
  %v82 = vld [vmem:[%s1 + $0x1a0] sm:$0xff]
  %v83 = vld [vmem:[%s1 + $0x1a8] sm:$0xff]
  %v84 = vld [vmem:[%s1 + $0x1b0] sm:$0xff]
  %v85 = vld [vmem:[%s1 + $0x1b8] sm:$0xff]
  %v86 = vld [vmem:[%s1 + $0x1c0] sm:$0xff]
  %v87 = vld [vmem:[%s1 + $0x1c8] sm:$0xff]
  %v88 = vld [vmem:[%s1 + $0x1d0] sm:$0xff]
  %v89 = vld [vmem:[%s1 + $0x1d8] sm:$0xff]
  %v90 = vld [vmem:[%s1 + $0x1e0] sm:$0xff]
  %v91 = vld [vmem:[%s1 + $0x1e8] sm:$0xff]
  %v92 = vld [vmem:[%s1 + $0x1f0] sm:$0xff]
  %v93 = vld [vmem:[%s1 + $0x1f8] sm:$0xff]
  %v94 = vld [vmem:[%s1 + $0x200] sm:$0xff]
  %v95 = vld [vmem:[%s1 + $0x208] sm:$0xff]
  %v96 = vld [vmem:[%s1 + $0x210] sm:$0xff]
  %v97 = vld [vmem:[%s1 + $0x218] sm:$0xff]
  %v98 = vld [vmem:[%s1 + $0x220] sm:$0xff]
  %v99 = vld [vmem:[%s1 + $0x228] sm:$0xff]
  %v100 = vld [vmem:[%s1 + $0x230] sm:$0xff]
  %v101 = vld [vmem:[%s1 + $0x238] sm:$0xff]
  %v102 = vld [vmem:[%s1 + $0x240] sm:$0xff]
  %v103 = vld [vmem:[%s1 + $0x248] sm:$0xff]
  %v104 = vld [vmem:[%s1 + $0x250] sm:$0xff]
  %v105 = vld [vmem:[%s1 + $0x258] sm:$0xff]
  %v106 = vld [vmem:[%s1 + $0x260] sm:$0xff]
  %v107 = vld [vmem:[%s1 + $0x268] sm:$0xff]
  %v108 = vld [vmem:[%s1 + $0x270] sm:$0xff]
  %v109 = vld [vmem:[%s1 + $0x278] sm:$0xff]
  %v110 = vld [vmem:[%s1 + $0x280] sm:$0xff]
  %v111 = vld [vmem:[%s1 + $0x288] sm:$0xff]
  %v112 = vld [vmem:[%s1 + $0x290] sm:$0xff]
  %v113 = vld [vmem:[%s1 + $0x298] sm:$0xff]
  %v114 = vld [vmem:[%s1 + $0x2a0] sm:$0xff]
  %v115 = vld [vmem:[%s1 + $0x2a8] sm:$0xff]
  %v116 = vld [vmem:[%s1 + $0x2b0] sm:$0xff]
  %v117 = vld [vmem:[%s1 + $0x2b8] sm:$0xff]
  %v118 = vld [vmem:[%s1 + $0x2c0] sm:$0xff]
  %v119 = vld [vmem:[%s1 + $0x2c8] sm:$0xff]
  %v120 = vld [vmem:[%s1 + $0x2d0] sm:$0xff]
  %v121 = vld [vmem:[%s1 + $0x2d8] sm:$0xff]
  %v122 = vld [vmem:[%s1 + $0x2e0] sm:$0xff]
  %v123 = vld [vmem:[%s1 + $0x2e8] sm:$0xff]
  %v124 = vld [vmem:[%s1 + $0x2f0] sm:$0xff]
  %v125 = vld [vmem:[%s1 + $0x2f8] sm:$0xff]
  %v126 = vld [vmem:[%s1 + $0x300] sm:$0xff]
  %v127 = vld [vmem:[%s1 + $0x308] sm:$0xff]
  %vm128 = vcmask 130048
  %v130 = vsel %vm128, %v29, 0
  %132 = vmatprep.subr.mxu0 0.0
  %133 = vmatpush1.msra.mxu0 %v30
  %134 = vmatprep.subr.mxu0 0.0
  %135 = vmatpush1.msra.mxu0 %v31
  %136 = vmatprep.subr.mxu0 0.0
  %137 = vmatpush1.msra.mxu0 %v32
  %138 = vmatprep.subr.mxu0 0.0
  %139 = vmatpush1.msra.mxu0 %v33
  %140 = vmatprep.subr.mxu0 0.0
  %141 = vmatpush1.msra.mxu0 %v34
  %142 = vmatprep.subr.mxu0 0.0
  %143 = vmatpush1.msra.mxu0 %v35
  %144 = vmatprep.subr.mxu0 0.0
  %145 = vmatpush1.msra.mxu0 %v36
  %146 = vmatprep.subr.mxu0 0.0
  %147 = vmatpush1.msra.mxu0 %v37
  %148 = vmatprep.subr.mxu0 0.0
  %149 = vmatpush1.msra.mxu0 %v38
  %150 = vmatprep.subr.mxu0 0.0
  %151 = vmatpush1.msra.mxu0 %v39
  %152 = vmatprep.subr.mxu0 0.0
  %153 = vmatpush1.msra.mxu0 %v40
  %154 = vmatprep.subr.mxu0 0.0
  %155 = vmatpush1.msra.mxu0 %v41
  %156 = vmatprep.subr.mxu0 0.0
  %157 = vmatpush1.msra.mxu0 %v42
  %158 = vmatprep.subr.mxu0 0.0
  %159 = vmatpush1.msra.mxu0 %v43
  %160 = vmatprep.subr.mxu0 0.0
  %161 = vmatpush1.msra.mxu0 %v44
  %162 = vmatprep.subr.mxu0 0.0
  %163 = vmatpush1.msra.mxu0 %v45
  %164 = vmatprep.subr.mxu0 0.0
  %165 = vmatpush1.msra.mxu0 %v46
  %166 = vmatprep.subr.mxu0 0.0
  %167 = vmatpush1.msra.mxu0 %v47
  %168 = vmatprep.subr.mxu0 0.0
  %169 = vmatpush1.msra.mxu0 %v48
  %170 = vmatprep.subr.mxu0 0.0
  %171 = vmatpush1.msra.mxu0 %v49
  %172 = vmatprep.subr.mxu0 0.0
  %173 = vmatpush1.msra.mxu0 %v50
  %174 = vmatprep.subr.mxu0 0.0
  %175 = vmatpush1.msra.mxu0 %v51
  %176 = vmatprep.subr.mxu0 0.0
  %177 = vmatpush1.msra.mxu0 %v52
  %178 = vmatprep.subr.mxu0 0.0
  %179 = vmatpush1.msra.mxu0 %v53
  %180 = vmatprep.subr.mxu0 0.0
  %181 = vmatpush1.msra.mxu0 %v54
  %182 = vmatprep.subr.mxu0 0.0
  %183 = vmatpush1.msra.mxu0 %v55
  %184 = vmatprep.subr.mxu0 0.0
  %185 = vmatpush1.msra.mxu0 %v56
  %186 = vmatprep.subr.mxu0 0.0
  %187 = vmatpush1.msra.mxu0 %v57
  %188 = vmatprep.subr.mxu0 0.0
  %189 = vmatpush1.msra.mxu0 %v58
  %190 = vmatprep.subr.mxu0 0.0
  %191 = vmatpush1.msra.mxu0 %v59
  %192 = vmatprep.subr.mxu0 0.0
  %193 = vmatpush1.msra.mxu0 %v60
  %194 = vmatprep.subr.mxu0 0.0
  %195 = vmatpush1.msra.mxu0 %v61
  %196 = vmatprep.mubr.f32.mxu0 %v24
  %197 = vmatmul.mubr.f32.gmra.mrb[0].mxu0 %v23
  %v198 = vpop.f32.mrb[0].mxu0
  %v199 = vadd.f32 0.0, %v198
  %v200 = vpop.f32.mrb[0].mxu0
  %201 = vdwg.mxu0
  %202 = vmatprep.subr.mxu0 0.0
  %203 = vmatpush1.msra.mxu0 %v62
  %204 = vmatprep.subr.mxu0 0.0
  %205 = vmatpush1.msra.mxu0 %v63
  %206 = vmatprep.subr.mxu0 0.0
  %207 = vmatpush1.msra.mxu0 %v64
  %208 = vmatprep.subr.mxu0 0.0
  %209 = vmatpush1.msra.mxu0 %v65
  %210 = vmatprep.subr.mxu0 0.0
  %211 = vmatpush1.msra.mxu0 %v66
  %212 = vmatprep.subr.mxu0 0.0
  %213 = vmatpush1.msra.mxu0 %v67
  %214 = vmatprep.subr.mxu0 0.0
  %215 = vmatpush1.msra.mxu0 %v68
  %216 = vmatprep.subr.mxu0 0.0
  %217 = vmatpush1.msra.mxu0 %v69
  %218 = vmatprep.subr.mxu0 0.0
  %219 = vmatpush1.msra.mxu0 %v70
  %220 = vmatprep.subr.mxu0 0.0
  %221 = vmatpush1.msra.mxu0 %v71
  %222 = vmatprep.subr.mxu0 0.0
  %223 = vmatpush1.msra.mxu0 %v72
  %224 = vmatprep.subr.mxu0 0.0
  %225 = vmatpush1.msra.mxu0 %v73
  %226 = vmatprep.subr.mxu0 0.0
  %227 = vmatpush1.msra.mxu0 %v74
  %228 = vmatprep.subr.mxu0 0.0
  %229 = vmatpush1.msra.mxu0 %v75
  %230 = vmatprep.subr.mxu0 0.0
  %231 = vmatpush1.msra.mxu0 %v76
  %232 = vmatprep.subr.mxu0 0.0
  %233 = vmatpush1.msra.mxu0 %v77
  %234 = vmatprep.subr.mxu0 0.0
  %235 = vmatpush1.msra.mxu0 %v78
  %236 = vmatprep.subr.mxu0 0.0
  %237 = vmatpush1.msra.mxu0 %v79
  %238 = vmatprep.subr.mxu0 0.0
  %239 = vmatpush1.msra.mxu0 %v80
  %240 = vmatprep.subr.mxu0 0.0
  %241 = vmatpush1.msra.mxu0 %v81
  %242 = vmatprep.subr.mxu0 0.0
  %243 = vmatpush1.msra.mxu0 %v82
  %244 = vmatprep.subr.mxu0 0.0
  %245 = vmatpush1.msra.mxu0 %v83
  %246 = vmatprep.subr.mxu0 0.0
  %247 = vmatpush1.msra.mxu0 %v84
  %248 = vmatprep.subr.mxu0 0.0
  %249 = vmatpush1.msra.mxu0 %v85
  %250 = vmatprep.subr.mxu0 0.0
  %251 = vmatpush1.msra.mxu0 %v86
  %252 = vmatprep.subr.mxu0 0.0
  %253 = vmatpush1.msra.mxu0 %v87
  %254 = vmatprep.subr.mxu0 0.0
  %255 = vmatpush1.msra.mxu0 %v88
  %256 = vmatprep.subr.mxu0 0.0
  %257 = vmatpush1.msra.mxu0 %v89
  %258 = vmatprep.subr.mxu0 0.0
  %259 = vmatpush1.msra.mxu0 %v90
  %260 = vmatprep.subr.mxu0 0.0
  %261 = vmatpush1.msra.mxu0 %v91
  %262 = vmatprep.subr.mxu0 0.0
  %263 = vmatpush1.msra.mxu0 %v92
  %264 = vmatprep.subr.mxu0 0.0
  %265 = vmatpush1.msra.mxu0 %v93
  %266 = vmatprep.mubr.f32.mxu0 %v26
  %267 = vmatmul.mubr.f32.gmra.mrb[0].mxu0 %v25
  %v268 = vpop.f32.mrb[0].mxu0
  %v269 = vadd.f32 %v199, %v268
  %v270 = vpop.f32.mrb[0].mxu0
  %271 = vdwg.mxu0
  %272 = vmatprep.subr.mxu0 0.0
  %273 = vmatpush1.msra.mxu0 %v94
  %274 = vmatprep.subr.mxu0 0.0
  %275 = vmatpush1.msra.mxu0 %v95
  %276 = vmatprep.subr.mxu0 0.0
  %277 = vmatpush1.msra.mxu0 %v96
  %278 = vmatprep.subr.mxu0 0.0
  %279 = vmatpush1.msra.mxu0 %v97
  %280 = vmatprep.subr.mxu0 0.0
  %281 = vmatpush1.msra.mxu0 %v98
  %282 = vmatprep.subr.mxu0 0.0
  %283 = vmatpush1.msra.mxu0 %v99
  %284 = vmatprep.subr.mxu0 0.0
  %285 = vmatpush1.msra.mxu0 %v100
  %286 = vmatprep.subr.mxu0 0.0
  %287 = vmatpush1.msra.mxu0 %v101
  %288 = vmatprep.subr.mxu0 0.0
  %289 = vmatpush1.msra.mxu0 %v102
  %290 = vmatprep.subr.mxu0 0.0
  %291 = vmatpush1.msra.mxu0 %v103
  %292 = vmatprep.subr.mxu0 0.0
  %293 = vmatpush1.msra.mxu0 %v104
  %294 = vmatprep.subr.mxu0 0.0
  %295 = vmatpush1.msra.mxu0 %v105
  %296 = vmatprep.subr.mxu0 0.0
  %297 = vmatpush1.msra.mxu0 %v106
  %298 = vmatprep.subr.mxu0 0.0
  %299 = vmatpush1.msra.mxu0 %v107
  %300 = vmatprep.subr.mxu0 0.0
  %301 = vmatpush1.msra.mxu0 %v108
  %302 = vmatprep.subr.mxu0 0.0
  %303 = vmatpush1.msra.mxu0 %v109
  %304 = vmatprep.subr.mxu0 0.0
  %305 = vmatpush1.msra.mxu0 %v110
  %306 = vmatprep.subr.mxu0 0.0
  %307 = vmatpush1.msra.mxu0 %v111
  %308 = vmatprep.subr.mxu0 0.0
  %309 = vmatpush1.msra.mxu0 %v112
  %310 = vmatprep.subr.mxu0 0.0
  %311 = vmatpush1.msra.mxu0 %v113
  %312 = vmatprep.subr.mxu0 0.0
  %313 = vmatpush1.msra.mxu0 %v114
  %314 = vmatprep.subr.mxu0 0.0
  %315 = vmatpush1.msra.mxu0 %v115
  %316 = vmatprep.subr.mxu0 0.0
  %317 = vmatpush1.msra.mxu0 %v116
  %318 = vmatprep.subr.mxu0 0.0
  %319 = vmatpush1.msra.mxu0 %v117
  %320 = vmatprep.subr.mxu0 0.0
  %321 = vmatpush1.msra.mxu0 %v118
  %322 = vmatprep.subr.mxu0 0.0
  %323 = vmatpush1.msra.mxu0 %v119
  %324 = vmatprep.subr.mxu0 0.0
  %325 = vmatpush1.msra.mxu0 %v120
  %326 = vmatprep.subr.mxu0 0.0
  %327 = vmatpush1.msra.mxu0 %v121
  %328 = vmatprep.subr.mxu0 0.0
  %329 = vmatpush1.msra.mxu0 %v122
  %330 = vmatprep.subr.mxu0 0.0
  %331 = vmatpush1.msra.mxu0 %v123
  %332 = vmatprep.subr.mxu0 0.0
  %333 = vmatpush1.msra.mxu0 %v124
  %334 = vmatprep.subr.mxu0 0.0
  %335 = vmatpush1.msra.mxu0 %v125
  %336 = vmatprep.mubr.f32.mxu0 %v28
  %337 = vmatmul.mubr.f32.gmra.mrb[0].mxu0 %v27
  %v338 = vpop.f32.mrb[0].mxu0
  %v339 = vadd.f32 %v269, %v338
  %v340 = vpop.f32.mrb[0].mxu0
  %341 = vdwg.mxu0
  %342 = vmatprep.subr.mxu0 0.0
  %343 = vmatpush1.msra.mxu0 %v126
  %344 = vmatprep.subr.mxu0 0.0
  %345 = vmatpush1.msra.mxu0 %v127
  %346 = vmatprep.subr.mxu0 0.0
  %347 = vmatpush1.msra.mxu0 0.0
  %348 = vmatprep.subr.mxu0 0.0
  %349 = vmatpush1.msra.mxu0 0.0
  %350 = vmatprep.subr.mxu0 0.0
  %351 = vmatpush1.msra.mxu0 0.0
  %352 = vmatprep.subr.mxu0 0.0
  %353 = vmatpush1.msra.mxu0 0.0
  %354 = vmatprep.subr.mxu0 0.0
  %355 = vmatpush1.msra.mxu0 0.0
  %356 = vmatprep.subr.mxu0 0.0
  %357 = vmatpush1.msra.mxu0 0.0
  %358 = vmatprep.subr.mxu0 0.0
  %359 = vmatpush1.msra.mxu0 0.0
  %360 = vmatprep.subr.mxu0 0.0
  %361 = vmatpush1.msra.mxu0 0.0
  %362 = vmatprep.subr.mxu0 0.0
  %363 = vmatpush1.msra.mxu0 0.0
  %364 = vmatprep.subr.mxu0 0.0
  %365 = vmatpush1.msra.mxu0 0.0
  %366 = vmatprep.subr.mxu0 0.0
  %367 = vmatpush1.msra.mxu0 0.0
  %368 = vmatprep.subr.mxu0 0.0
  %369 = vmatpush1.msra.mxu0 0.0
  %370 = vmatprep.subr.mxu0 0.0
  %371 = vmatpush1.msra.mxu0 0.0
  %372 = vmatprep.subr.mxu0 0.0
  %373 = vmatpush1.msra.mxu0 0.0
  %374 = vmatprep.subr.mxu0 0.0
  %375 = vmatpush1.msra.mxu0 0.0
  %376 = vmatprep.subr.mxu0 0.0
  %377 = vmatpush1.msra.mxu0 0.0
  %378 = vmatprep.subr.mxu0 0.0
  %379 = vmatpush1.msra.mxu0 0.0
  %380 = vmatprep.subr.mxu0 0.0
  %381 = vmatpush1.msra.mxu0 0.0
  %382 = vmatprep.subr.mxu0 0.0
  %383 = vmatpush1.msra.mxu0 0.0
  %384 = vmatprep.subr.mxu0 0.0
  %385 = vmatpush1.msra.mxu0 0.0
  %386 = vmatprep.subr.mxu0 0.0
  %387 = vmatpush1.msra.mxu0 0.0
  %388 = vmatprep.subr.mxu0 0.0
  %389 = vmatpush1.msra.mxu0 0.0
  %390 = vmatprep.subr.mxu0 0.0
  %391 = vmatpush1.msra.mxu0 0.0
  %392 = vmatprep.subr.mxu0 0.0
  %393 = vmatpush1.msra.mxu0 0.0
  %394 = vmatprep.subr.mxu0 0.0
  %395 = vmatpush1.msra.mxu0 0.0
  %396 = vmatprep.subr.mxu0 0.0
  %397 = vmatpush1.msra.mxu0 0.0
  %398 = vmatprep.subr.mxu0 0.0
  %399 = vmatpush1.msra.mxu0 0.0
  %400 = vmatprep.subr.mxu0 0.0
  %401 = vmatpush1.msra.mxu0 0.0
  %402 = vmatprep.subr.mxu0 0.0
  %403 = vmatpush1.msra.mxu0 0.0
  %404 = vmatprep.subr.mxu0 0.0
  %405 = vmatpush1.msra.mxu0 0.0
  %406 = vmatprep.mubr.f32.mxu0 0.0
  %407 = vmatmul.mubr.f32.gmra.mrb[0].mxu0 %v130
  %v408 = vpop.f32.mrb[0].mxu0
  %v409 = vadd.f32 %v339, %v408
  %v410 = vpop.f32.mrb[0].mxu0
  %411 = vdwg.mxu0
  %v412 = vand.u32 2147483647, %v409
  %vm413 = vcmp.le.f32.partialorder %v412, 0.7853982
  %vm414 = vcmp.lt.s32.totalorder %v409, 0
  %v415 = vand.u32 %v409, 2139095040
  %v416 = vshrl.u32 %v415, 23
  %v417 = vsub.s32 %v416, 127
  %v418 = vand.u32 2147483647, %v409
  %v419 = vand.u32 %v418, 8388607
  %v420 = vor.u32 %v419, 8388608
  %v421 = vsub.s32 0, %v420
  %v422 = vadd.s32 %v417, 1
  %vm423 = vcmp.gt.s32.totalorder %v422, 0
  %v424 = vsel %vm423, %v422, 0
  %v425 = vshrl.u32 %v424, 5
  %v426 = vand.u32 %v424, 31
  %v427 = vsub.s32 32, %v426
  %v428 = vshrl.u32 683565275, %v427
  %v429 = vshll.u32 683565275, %v426
  %v430 = vshrl.u32 2475754826, %v427
  %v431 = vor.u32 %v429, %v430
  %v432 = vshll.u32 2475754826, %v426
  %v433 = vshrl.u32 2131351028, %v427
  %v434 = vor.u32 %v432, %v433
  %v435 = vshll.u32 2131351028, %v426
  %v436 = vshrl.u32 2102212464, %v427
  %v437 = vor.u32 %v435, %v436
  %v438 = vshll.u32 2102212464, %v426
  %v439 = vshrl.u32 920167782, %v427
  %v440 = vor.u32 %v438, %v439
  %v441 = vshll.u32 920167782, %v426
  %v442 = vshrl.u32 1326507024, %v427
  %v443 = vor.u32 %v441, %v442
  %vm444 = vcmp.lt.s32.totalorder %v425, 1
  %vm445 = vcmp.lt.s32.totalorder %v425, 2
  %vm446 = vcmp.lt.s32.totalorder %v425, 3
  %vm447 = vcmp.lt.s32.totalorder %v425, 4
  %v448 = vsel %vm444, %v428, %v431
  %v449 = vsel %vm447, %v437, 2102212464
  %v450 = vsel %vm446, %v434, %v449
  %v451 = vsel %vm445, %v448, %v450
  %v452 = vsel %vm444, %v431, %v434
  %v453 = vsel %vm447, %v440, 920167782
  %v454 = vsel %vm446, %v437, %v453
  %v455 = vsel %vm445, %v452, %v454
  %v456 = vsel %vm444, %v434, %v437
  %v457 = vsel %vm447, %v443, 1326507024
  %v458 = vsel %vm446, %v440, %v457
  %v459 = vsel %vm445, %v456, %v458
  %v460 = vshll.u32 %v420, 8
  %v461 = vmul.u32.u64.compose %v460, %v459
  %v462 = vextract.low.u32 %v461
  %v463 = vextract.high.u32 %v461
  %v464 = vmul.u32.u64.compose %v460, %v455
  %v465 = vextract.low.u32 %v464
  %v466 = vextract.high.u32 %v464
  %v467 = vmul.u32 %v460, %v451
  %v468 = vadd.s32 %v463, %v465
  %vm469 = vc.u32 %v463, %v465
  %v470 = vadd.s32 %v466, 1
  %v471 = vsel %vm469, %v470, %v466
  %v472 = vadd.s32 %v467, %v471
  %v473 = vadd.s32 %v472, 536870912
  %v474 = vshrl.u32 %v473, 30
  %v475 = vshll.u32 %v474, 30
  %v476 = vsub.s32 %v472, %v475
  %vm477 = vcmp.lt.s32.totalorder %v476, 0
  %v478 = vsub.s32 0, %v476
  %v479 = vsel %vm477, %v478, %v476
  %v480 = vclz %v479
  %v481 = vsub.s32 %v480, 2
  %vm482 = vcmp.gt.s32.totalorder 0, %v481
  %v483 = vsel %vm482, 0, %v481
  %v484 = vsub.s32 32, %v483
  %v485 = vshll.u32 %v476, %v483
  %v486 = vshrl.u32 %v468, %v484
  %v487 = vor.u32 %v485, %v486
  %v488 = vsub.s32 4294967266, %v483
  %v489 = vadd.s32 %v488, 127
  %v490 = vshll.u32 %v489, 23
  %v491 = vor.u32 4788187, %v490
  %v492 = vand.u32 2147483647, %v491
  %v494 = vcvt.s32.f32 %v487
  %v495 = vmul.f32 %v494, %v492
  %v496 = vxor.u32 %v495, 2147483648
  %v497 = vsel %vm414, %v496, %v495
  %v498 = vsub.s32 4, %v474
  %v499 = vsel %vm414, %v498, %v474
  %v500 = vsel %vm413, %v409, %v497
  %v501 = vsel %vm413, 0, %v499
  %v502 = vcosq.f32.pop %v500
  %v503 = vsinq.f32.pop %v500
  %vm504 = vweird.f32 %v409
  %v505 = vand.u32 %v501, 3
  %vm506 = vcmp.lt.s32.totalorder %v505, 2
  %vm507 = vcmp.eq.s32.totalorder %v505, 0
  %v508 = vxor.u32 %v503, 2147483648
  %v509 = vsel %vm507, %v502, %v508
  %vm510 = vcmp.eq.s32.totalorder %v505, 2
  %v511 = vxor.u32 %v502, 2147483648
  %v512 = vsel %vm510, %v511, %v503
  %v513 = vsel %vm506, %v509, %v512
  %v514 = vsel %vm504, nan, %v513
  %v515 = vand.u32 2147483647, %v409
  %vm516 = vcmp.le.f32.partialorder %v515, 0.7853982
  %vm517 = vcmp.lt.s32.totalorder %v409, 0
  %v518 = vand.u32 %v409, 2139095040
  %v519 = vshrl.u32 %v518, 23
  %v520 = vsub.s32 %v519, 127
  %v521 = vand.u32 2147483647, %v409
  %v522 = vand.u32 %v521, 8388607
  %v523 = vor.u32 %v522, 8388608
  %v524 = vsub.s32 0, %v523
  %v525 = vadd.s32 %v520, 1
  %vm526 = vcmp.gt.s32.totalorder %v525, 0
  %v527 = vsel %vm526, %v525, 0
  %v528 = vshrl.u32 %v527, 5
  %v529 = vand.u32 %v527, 31
  %v530 = vsub.s32 32, %v529
  %v531 = vshrl.u32 683565275, %v530
  %v532 = vshll.u32 683565275, %v529
  %v533 = vshrl.u32 2475754826, %v530
  %v534 = vor.u32 %v532, %v533
  %v535 = vshll.u32 2475754826, %v529
  %v536 = vshrl.u32 2131351028, %v530
  %v537 = vor.u32 %v535, %v536
  %v538 = vshll.u32 2131351028, %v529
  %v539 = vshrl.u32 2102212464, %v530
  %v540 = vor.u32 %v538, %v539
  %v541 = vshll.u32 2102212464, %v529
  %v542 = vshrl.u32 920167782, %v530
  %v543 = vor.u32 %v541, %v542
  %v544 = vshll.u32 920167782, %v529
  %v545 = vshrl.u32 1326507024, %v530
  %v546 = vor.u32 %v544, %v545
  %vm547 = vcmp.lt.s32.totalorder %v528, 1
  %vm548 = vcmp.lt.s32.totalorder %v528, 2
  %vm549 = vcmp.lt.s32.totalorder %v528, 3
  %vm550 = vcmp.lt.s32.totalorder %v528, 4
  %v551 = vsel %vm547, %v531, %v534
  %v552 = vsel %vm550, %v540, 2102212464
  %v553 = vsel %vm549, %v537, %v552
  %v554 = vsel %vm548, %v551, %v553
  %v555 = vsel %vm547, %v534, %v537
  %v556 = vsel %vm550, %v543, 920167782
  %v557 = vsel %vm549, %v540, %v556
  %v558 = vsel %vm548, %v555, %v557
  %v559 = vsel %vm547, %v537, %v540
  %v560 = vsel %vm550, %v546, 1326507024
  %v561 = vsel %vm549, %v543, %v560
  %v562 = vsel %vm548, %v559, %v561
  %v563 = vshll.u32 %v523, 8
  %v564 = vmul.u32.u64.compose %v563, %v562
  %v565 = vextract.low.u32 %v564
  %v566 = vextract.high.u32 %v564
  %v567 = vmul.u32.u64.compose %v563, %v558
  %v568 = vextract.low.u32 %v567
  %v569 = vextract.high.u32 %v567
  %v570 = vmul.u32 %v563, %v554
  %v571 = vadd.s32 %v566, %v568
  %vm572 = vc.u32 %v566, %v568
  %v573 = vadd.s32 %v569, 1
  %v574 = vsel %vm572, %v573, %v569
  %v575 = vadd.s32 %v570, %v574
  %v576 = vadd.s32 %v575, 536870912
  %v577 = vshrl.u32 %v576, 30
  %v578 = vshll.u32 %v577, 30
  %v579 = vsub.s32 %v575, %v578
  %vm580 = vcmp.lt.s32.totalorder %v579, 0
  %v581 = vsub.s32 0, %v579
  %v582 = vsel %vm580, %v581, %v579
  %v583 = vclz %v582
  %v584 = vsub.s32 %v583, 2
  %vm585 = vcmp.gt.s32.totalorder 0, %v584
  %v586 = vsel %vm585, 0, %v584
  %v587 = vsub.s32 32, %v586
  %v588 = vshll.u32 %v579, %v586
  %v589 = vshrl.u32 %v571, %v587
  %v590 = vor.u32 %v588, %v589
  %v591 = vsub.s32 4294967266, %v586
  %v592 = vadd.s32 %v591, 127
  %v593 = vshll.u32 %v592, 23
  %v594 = vor.u32 4788187, %v593
  %v595 = vand.u32 2147483647, %v594
  %v597 = vcvt.s32.f32 %v590
  %v598 = vmul.f32 %v597, %v595
  %v599 = vxor.u32 %v598, 2147483648
  %v600 = vsel %vm517, %v599, %v598
  %v601 = vsub.s32 4, %v577
  %v602 = vsel %vm517, %v601, %v577
  %v603 = vsel %vm516, %v409, %v600
  %v604 = vsel %vm516, 0, %v602
  %v605 = vcosq.f32.pop %v603
  %v606 = vsinq.f32.pop %v603
  %vm607 = vweird.f32 %v409
  %v608 = vadd.s32 %v604, 3
  %v609 = vand.u32 %v608, 3
  %vm610 = vcmp.lt.s32.totalorder %v609, 2
  %vm611 = vcmp.eq.s32.totalorder %v609, 0
  %v612 = vxor.u32 %v606, 2147483648
  %v613 = vsel %vm611, %v605, %v612
  %vm614 = vcmp.eq.s32.totalorder %v609, 2
  %v615 = vxor.u32 %v605, 2147483648
  %v616 = vsel %vm614, %v615, %v606
  %v617 = vsel %vm610, %v613, %v616
  %v618 = vsel %vm607, nan, %v617
  %v619 = vlaneseq
  %v620 = vand.u32 %v619, 127
  %v621 = vshra.s32 %v620, 3
  %v622 = vand.u32 %v621, 1
  %vm623 = vcmp.eq.s32.totalorder %v622, 1
  %v624 = vshra.s32 %v620, 2
  %v625 = vand.u32 %v624, 1
  %vm626 = vcmp.eq.s32.totalorder %v625, 1
  %v627 = vshra.s32 %v620, 1
  %v628 = vand.u32 %v627, 1
  %vm629 = vcmp.eq.s32.totalorder %v628, 1
  %v630 = vand.u32 %v620, 1
  %vm631 = vcmp.eq.s32.totalorder %v630, 1
  %633 = vset.pattern.permute.xlu0 0
  %634 = vperm.xlu0 %633, %v618
  %v635 = vpop.permute.xlu0 %634
  %638 = vset.pattern.permute.xlu0 0
  %639 = vperm.xlu0 %638, %v514
  %v640 = vpop.permute.xlu0 %639
  %v642 = vsel %vm623, %v635, %v640
  %643 = vset.pattern.permute.xlu0 1
  %644 = vperm.xlu0 %643, %v618
  %v645 = vpop.permute.xlu0 %644
  %647 = vset.pattern.permute.xlu0 1
  %648 = vperm.xlu0 %647, %v514
  %v649 = vpop.permute.xlu0 %648
  %v651 = vsel %vm626, %v645, %v649
  %v652 = vmul.f32 %v642, %v651
  %653 = vset.pattern.permute.xlu0 2
  %654 = vperm.xlu0 %653, %v618
  %v655 = vpop.permute.xlu0 %654
  %657 = vset.pattern.permute.xlu0 2
  %658 = vperm.xlu0 %657, %v514
  %v659 = vpop.permute.xlu0 %658
  %v661 = vsel %vm629, %v655, %v659
  %v662 = vmul.f32 %v652, %v661
  %663 = vset.pattern.permute.xlu0 3
  %664 = vperm.xlu0 %663, %v618
  %v665 = vpop.permute.xlu0 %664
  %667 = vset.pattern.permute.xlu0 3
  %668 = vperm.xlu0 %667, %v514
  %v669 = vpop.permute.xlu0 %668
  %v671 = vsel %vm631, %v665, %v669
  %v672 = vmul.f32 %v662, %v671
  %673 = vset.pattern.permute.xlu0 4
  %674 = vperm.xlu0 %673, %v618
  %v675 = vpop.permute.xlu0 %674
  %677 = vset.pattern.permute.xlu0 4
  %678 = vperm.xlu0 %677, %v514
  %v679 = vpop.permute.xlu0 %678
  %v681 = vsel %vm623, %v675, %v679
  %682 = vset.pattern.permute.xlu0 5
  %683 = vperm.xlu0 %682, %v618
  %v684 = vpop.permute.xlu0 %683
  %686 = vset.pattern.permute.xlu0 5
  %687 = vperm.xlu0 %686, %v514
  %v688 = vpop.permute.xlu0 %687
  %v690 = vsel %vm626, %v684, %v688
  %v691 = vmul.f32 %v681, %v690
  %692 = vset.pattern.permute.xlu0 6
  %693 = vperm.xlu0 %692, %v618
  %v694 = vpop.permute.xlu0 %693
  %696 = vset.pattern.permute.xlu0 6
  %697 = vperm.xlu0 %696, %v514
  %v698 = vpop.permute.xlu0 %697
  %v700 = vsel %vm629, %v694, %v698
  %v701 = vmul.f32 %v691, %v700
  %702 = vset.pattern.permute.xlu0 7
  %703 = vperm.xlu0 %702, %v618
  %v704 = vpop.permute.xlu0 %703
  %706 = vset.pattern.permute.xlu0 7
  %707 = vperm.xlu0 %706, %v514
  %v708 = vpop.permute.xlu0 %707
  %v710 = vsel %vm631, %v704, %v708
  %v711 = vmul.f32 %v701, %v710
  %712 = vset.pattern.permute.xlu0 8
  %713 = vperm.xlu0 %712, %v618
  %v714 = vpop.permute.xlu0 %713
  %716 = vset.pattern.permute.xlu0 8
  %717 = vperm.xlu0 %716, %v514
  %v718 = vpop.permute.xlu0 %717
  %v720 = vsel %vm623, %v714, %v718
  %721 = vset.pattern.permute.xlu0 9
  %722 = vperm.xlu0 %721, %v618
  %v723 = vpop.permute.xlu0 %722
  %725 = vset.pattern.permute.xlu0 9
  %726 = vperm.xlu0 %725, %v514
  %v727 = vpop.permute.xlu0 %726
  %v729 = vsel %vm626, %v723, %v727
  %v730 = vmul.f32 %v720, %v729
  %731 = vset.pattern.permute.xlu0 10
  %732 = vperm.xlu0 %731, %v618
  %v733 = vpop.permute.xlu0 %732
  %735 = vset.pattern.permute.xlu0 10
  %736 = vperm.xlu0 %735, %v514
  %v737 = vpop.permute.xlu0 %736
  %v739 = vsel %vm629, %v733, %v737
  %v740 = vmul.f32 %v730, %v739
  %741 = vset.pattern.permute.xlu0 11
  %742 = vperm.xlu0 %741, %v618
  %v743 = vpop.permute.xlu0 %742
  %745 = vset.pattern.permute.xlu0 11
  %746 = vperm.xlu0 %745, %v514
  %v747 = vpop.permute.xlu0 %746
  %v749 = vsel %vm631, %v743, %v747
  %v750 = vmul.f32 %v740, %v749
  %751 = vset.pattern.permute.xlu0 12
  %752 = vperm.xlu0 %751, %v618
  %v753 = vpop.permute.xlu0 %752
  %755 = vset.pattern.permute.xlu0 12
  %756 = vperm.xlu0 %755, %v514
  %v757 = vpop.permute.xlu0 %756
  %v759 = vsel %vm623, %v753, %v757
  %760 = vset.pattern.permute.xlu0 13
  %761 = vperm.xlu0 %760, %v618
  %v762 = vpop.permute.xlu0 %761
  %764 = vset.pattern.permute.xlu0 13
  %765 = vperm.xlu0 %764, %v514
  %v766 = vpop.permute.xlu0 %765
  %v768 = vsel %vm626, %v762, %v766
  %v769 = vmul.f32 %v759, %v768
  %770 = vset.pattern.permute.xlu0 14
  %771 = vperm.xlu0 %770, %v618
  %v772 = vpop.permute.xlu0 %771
  %774 = vset.pattern.permute.xlu0 14
  %775 = vperm.xlu0 %774, %v514
  %v776 = vpop.permute.xlu0 %775
  %v778 = vsel %vm629, %v772, %v776
  %v779 = vmul.f32 %v769, %v778
  %780 = vset.pattern.permute.xlu0 15
  %781 = vperm.xlu0 %780, %v618
  %v782 = vpop.permute.xlu0 %781
  %784 = vset.pattern.permute.xlu0 15
  %785 = vperm.xlu0 %784, %v514
  %v786 = vpop.permute.xlu0 %785
  %v788 = vsel %vm631, %v782, %v786
  %v789 = vmul.f32 %v779, %v788
  %791 = vrot.lane.b32.xlu0 %v711, 16
  %v792 = vpop.permute.xlu0 %791
  %795 = vrot.lane.b32.xlu0 %v750, 32
  %v796 = vpop.permute.xlu0 %795
  %799 = vrot.lane.b32.xlu0 %v789, 48
  %v800 = vpop.permute.xlu0 %799
  %v802 = vsel %vm128, %v672, %v792
  %vm803 = vcmask 261120
  %v804 = vsel %vm803, %v802, %v796
  %vm805 = vcmask 392192
  %v806 = vsel %vm805, %v804, %v800
  %v807 = vld [vmem:[%s2] sm:$0xff]
  %v808 = vld [vmem:[%s2 + $0x8] sm:$0xff]
  %v809 = vld [vmem:[%s2 + $0x10] sm:$0xff]
  %v810 = vld [vmem:[%s2 + $0x18] sm:$0xff]
  %v811 = vld [vmem:[%s2 + $0x20] sm:$0xff]
  %v812 = vld [vmem:[%s2 + $0x28] sm:$0xff]
  %v813 = vld [vmem:[%s2 + $0x30] sm:$0xff]
  %v814 = vld [vmem:[%s2 + $0x38] sm:$0xff]
  %vm815 = vcmask 523264
  %v817 = vsel %vm815, %v806, 0
  %819 = vmatprep.subr.mxu0 0.0
  %820 = vmatpush1.msra.mxu0 %v807
  %821 = vmatprep.subr.mxu0 0.0
  %822 = vmatpush1.msra.mxu0 %v808
  %823 = vmatprep.subr.mxu0 0.0
  %824 = vmatpush1.msra.mxu0 %v809
  %825 = vmatprep.subr.mxu0 0.0
  %826 = vmatpush1.msra.mxu0 %v810
  %827 = vmatprep.subr.mxu0 0.0
  %828 = vmatpush1.msra.mxu0 %v811
  %829 = vmatprep.subr.mxu0 0.0
  %830 = vmatpush1.msra.mxu0 %v812
  %831 = vmatprep.subr.mxu0 0.0
  %832 = vmatpush1.msra.mxu0 %v813
  %833 = vmatprep.subr.mxu0 0.0
  %834 = vmatpush1.msra.mxu0 %v814
  %835 = vmatprep.subr.mxu0 0.0
  %836 = vmatpush1.msra.mxu0 0.0
  %837 = vmatprep.subr.mxu0 0.0
  %838 = vmatpush1.msra.mxu0 0.0
  %839 = vmatprep.subr.mxu0 0.0
  %840 = vmatpush1.msra.mxu0 0.0
  %841 = vmatprep.subr.mxu0 0.0
  %842 = vmatpush1.msra.mxu0 0.0
  %843 = vmatprep.subr.mxu0 0.0
  %844 = vmatpush1.msra.mxu0 0.0
  %845 = vmatprep.subr.mxu0 0.0
  %846 = vmatpush1.msra.mxu0 0.0
  %847 = vmatprep.subr.mxu0 0.0
  %848 = vmatpush1.msra.mxu0 0.0
  %849 = vmatprep.subr.mxu0 0.0
  %850 = vmatpush1.msra.mxu0 0.0
  %851 = vmatprep.subr.mxu0 0.0
  %852 = vmatpush1.msra.mxu0 0.0
  %853 = vmatprep.subr.mxu0 0.0
  %854 = vmatpush1.msra.mxu0 0.0
  %855 = vmatprep.subr.mxu0 0.0
  %856 = vmatpush1.msra.mxu0 0.0
  %857 = vmatprep.subr.mxu0 0.0
  %858 = vmatpush1.msra.mxu0 0.0
  %859 = vmatprep.subr.mxu0 0.0
  %860 = vmatpush1.msra.mxu0 0.0
  %861 = vmatprep.subr.mxu0 0.0
  %862 = vmatpush1.msra.mxu0 0.0
  %863 = vmatprep.subr.mxu0 0.0
  %864 = vmatpush1.msra.mxu0 0.0
  %865 = vmatprep.subr.mxu0 0.0
  %866 = vmatpush1.msra.mxu0 0.0
  %867 = vmatprep.subr.mxu0 0.0
  %868 = vmatpush1.msra.mxu0 0.0
  %869 = vmatprep.subr.mxu0 0.0
  %870 = vmatpush1.msra.mxu0 0.0
  %871 = vmatprep.subr.mxu0 0.0
  %872 = vmatpush1.msra.mxu0 0.0
  %873 = vmatprep.subr.mxu0 0.0
  %874 = vmatpush1.msra.mxu0 0.0
  %875 = vmatprep.subr.mxu0 0.0
  %876 = vmatpush1.msra.mxu0 0.0
  %877 = vmatprep.subr.mxu0 0.0
  %878 = vmatpush1.msra.mxu0 0.0
  %879 = vmatprep.subr.mxu0 0.0
  %880 = vmatpush1.msra.mxu0 0.0
  %881 = vmatprep.subr.mxu0 0.0
  %882 = vmatpush1.msra.mxu0 0.0
  %883 = vmatprep.mubr.f32.mxu0 0.0
  %884 = vmatmul.mubr.f32.gmra.mrb[0].mxu0 %v817
  %v885 = vpop.f32.mrb[0].mxu0
  %v886 = vadd.f32 0.0, %v885
  %v887 = vpop.f32.mrb[0].mxu0
  %888 = vdwg.mxu0
  %v889 = vmul.f32 %v886, %v886
  %v890 = vld [vmem:[%s3] sm:$0xff]
  %v891 = vld [vmem:[%s3 + $0x8] sm:$0xff]
  %v892 = vld [vmem:[%s3 + $0x10] sm:$0xff]
  %v893 = vld [vmem:[%s3 + $0x18] sm:$0xff]
  %v894 = vld [vmem:[%s3 + $0x20] sm:$0xff]
  %v895 = vld [vmem:[%s3 + $0x28] sm:$0xff]
  %v896 = vld [vmem:[%s3 + $0x30] sm:$0xff]
  %v897 = vld [vmem:[%s3 + $0x38] sm:$0xff]
  %v898 = vld [vmem:[%s3 + $0x40] sm:$0xff]
  %v899 = vld [vmem:[%s3 + $0x48] sm:$0xff]
  %v900 = vld [vmem:[%s3 + $0x50] sm:$0xff]
  %v901 = vld [vmem:[%s3 + $0x58] sm:$0xff]
  %v902 = vld [vmem:[%s3 + $0x60] sm:$0xff]
  %v903 = vld [vmem:[%s3 + $0x68] sm:$0xff]
  %v904 = vld [vmem:[%s3 + $0x70] sm:$0xff]
  %v905 = vld [vmem:[%s3 + $0x78] sm:$0xff]
  %906 = vmatprep.subr.mxu0 0.0
  %907 = vmatpush1.msra.mxu0 %v890
  %908 = vmatprep.subr.mxu0 0.0
  %909 = vmatpush1.msra.mxu0 %v891
  %910 = vmatprep.subr.mxu0 0.0
  %911 = vmatpush1.msra.mxu0 %v892
  %912 = vmatprep.subr.mxu0 0.0
  %913 = vmatpush1.msra.mxu0 %v893
  %914 = vmatprep.subr.mxu0 0.0
  %915 = vmatpush1.msra.mxu0 %v894
  %916 = vmatprep.subr.mxu0 0.0
  %917 = vmatpush1.msra.mxu0 %v895
  %918 = vmatprep.subr.mxu0 0.0
  %919 = vmatpush1.msra.mxu0 %v896
  %920 = vmatprep.subr.mxu0 0.0
  %921 = vmatpush1.msra.mxu0 %v897
  %922 = vmatprep.subr.mxu0 0.0
  %923 = vmatpush1.msra.mxu0 %v898
  %924 = vmatprep.subr.mxu0 0.0
  %925 = vmatpush1.msra.mxu0 %v899
  %926 = vmatprep.subr.mxu0 0.0
  %927 = vmatpush1.msra.mxu0 %v900
  %928 = vmatprep.subr.mxu0 0.0
  %929 = vmatpush1.msra.mxu0 %v901
  %930 = vmatprep.subr.mxu0 0.0
  %931 = vmatpush1.msra.mxu0 %v902
  %932 = vmatprep.subr.mxu0 0.0
  %933 = vmatpush1.msra.mxu0 %v903
  %934 = vmatprep.subr.mxu0 0.0
  %935 = vmatpush1.msra.mxu0 %v904
  %936 = vmatprep.subr.mxu0 0.0
  %937 = vmatpush1.msra.mxu0 %v905
  %938 = vmatprep.subr.mxu0 0.0
  %939 = vmatpush1.msra.mxu0 0.0
  %940 = vmatprep.subr.mxu0 0.0
  %941 = vmatpush1.msra.mxu0 0.0
  %942 = vmatprep.subr.mxu0 0.0
  %943 = vmatpush1.msra.mxu0 0.0
  %944 = vmatprep.subr.mxu0 0.0
  %945 = vmatpush1.msra.mxu0 0.0
  %946 = vmatprep.subr.mxu0 0.0
  %947 = vmatpush1.msra.mxu0 0.0
  %948 = vmatprep.subr.mxu0 0.0
  %949 = vmatpush1.msra.mxu0 0.0
  %950 = vmatprep.subr.mxu0 0.0
  %951 = vmatpush1.msra.mxu0 0.0
  %952 = vmatprep.subr.mxu0 0.0
  %953 = vmatpush1.msra.mxu0 0.0
  %954 = vmatprep.subr.mxu0 0.0
  %955 = vmatpush1.msra.mxu0 0.0
  %956 = vmatprep.subr.mxu0 0.0
  %957 = vmatpush1.msra.mxu0 0.0
  %958 = vmatprep.subr.mxu0 0.0
  %959 = vmatpush1.msra.mxu0 0.0
  %960 = vmatprep.subr.mxu0 0.0
  %961 = vmatpush1.msra.mxu0 0.0
  %962 = vmatprep.subr.mxu0 0.0
  %963 = vmatpush1.msra.mxu0 0.0
  %964 = vmatprep.subr.mxu0 0.0
  %965 = vmatpush1.msra.mxu0 0.0
  %966 = vmatprep.subr.mxu0 0.0
  %967 = vmatpush1.msra.mxu0 0.0
  %968 = vmatprep.subr.mxu0 0.0
  %969 = vmatpush1.msra.mxu0 0.0
  %970 = vmatprep.mubr.f32.mxu0 0.0
  %971 = vmatmul.mubr.f32.gmra.mrb[0].mxu0 %v889
  %v972 = vpop.f32.mrb[0].mxu0
  %v973 = vadd.f32 0.0, %v972
  %v974 = vpop.f32.mrb[0].mxu0
  %975 = vdwg.mxu0
  %v976 = vand.u32 2147483647, %v973
  %vm977 = vcmp.le.f32.partialorder %v976, 0.7853982
  %vm978 = vcmp.lt.s32.totalorder %v973, 0
  %v979 = vand.u32 %v973, 2139095040
  %v980 = vshrl.u32 %v979, 23
  %v981 = vsub.s32 %v980, 127
  %v982 = vand.u32 2147483647, %v973
  %v983 = vand.u32 %v982, 8388607
  %v984 = vor.u32 %v983, 8388608
  %v985 = vsub.s32 0, %v984
  %v986 = vadd.s32 %v981, 1
  %vm987 = vcmp.gt.s32.totalorder %v986, 0
  %v988 = vsel %vm987, %v986, 0
  %v989 = vshrl.u32 %v988, 5
  %v990 = vand.u32 %v988, 31
  %v991 = vsub.s32 32, %v990
  %v992 = vshrl.u32 683565275, %v991
  %v993 = vshll.u32 683565275, %v990
  %v994 = vshrl.u32 2475754826, %v991
  %v995 = vor.u32 %v993, %v994
  %v996 = vshll.u32 2475754826, %v990
  %v997 = vshrl.u32 2131351028, %v991
  %v998 = vor.u32 %v996, %v997
  %v999 = vshll.u32 2131351028, %v990
  %v1000 = vshrl.u32 2102212464, %v991
  %v1001 = vor.u32 %v999, %v1000
  %v1002 = vshll.u32 2102212464, %v990
  %v1003 = vshrl.u32 920167782, %v991
  %v1004 = vor.u32 %v1002, %v1003
  %v1005 = vshll.u32 920167782, %v990
  %v1006 = vshrl.u32 1326507024, %v991
  %v1007 = vor.u32 %v1005, %v1006
  %vm1008 = vcmp.lt.s32.totalorder %v989, 1
  %vm1009 = vcmp.lt.s32.totalorder %v989, 2
  %vm1010 = vcmp.lt.s32.totalorder %v989, 3
  %vm1011 = vcmp.lt.s32.totalorder %v989, 4
  %v1012 = vsel %vm1008, %v992, %v995
  %v1013 = vsel %vm1011, %v1001, 2102212464
  %v1014 = vsel %vm1010, %v998, %v1013
  %v1015 = vsel %vm1009, %v1012, %v1014
  %v1016 = vsel %vm1008, %v995, %v998
  %v1017 = vsel %vm1011, %v1004, 920167782
  %v1018 = vsel %vm1010, %v1001, %v1017
  %v1019 = vsel %vm1009, %v1016, %v1018
  %v1020 = vsel %vm1008, %v998, %v1001
  %v1021 = vsel %vm1011, %v1007, 1326507024
  %v1022 = vsel %vm1010, %v1004, %v1021
  %v1023 = vsel %vm1009, %v1020, %v1022
  %v1024 = vshll.u32 %v984, 8
  %v1025 = vmul.u32.u64.compose %v1024, %v1023
  %v1026 = vextract.low.u32 %v1025
  %v1027 = vextract.high.u32 %v1025
  %v1028 = vmul.u32.u64.compose %v1024, %v1019
  %v1029 = vextract.low.u32 %v1028
  %v1030 = vextract.high.u32 %v1028
  %v1031 = vmul.u32 %v1024, %v1015
  %v1032 = vadd.s32 %v1027, %v1029
  %vm1033 = vc.u32 %v1027, %v1029
  %v1034 = vadd.s32 %v1030, 1
  %v1035 = vsel %vm1033, %v1034, %v1030
  %v1036 = vadd.s32 %v1031, %v1035
  %v1037 = vadd.s32 %v1036, 536870912
  %v1038 = vshrl.u32 %v1037, 30
  %v1039 = vshll.u32 %v1038, 30
  %v1040 = vsub.s32 %v1036, %v1039
  %vm1041 = vcmp.lt.s32.totalorder %v1040, 0
  %v1042 = vsub.s32 0, %v1040
  %v1043 = vsel %vm1041, %v1042, %v1040
  %v1044 = vclz %v1043
  %v1045 = vsub.s32 %v1044, 2
  %vm1046 = vcmp.gt.s32.totalorder 0, %v1045
  %v1047 = vsel %vm1046, 0, %v1045
  %v1048 = vsub.s32 32, %v1047
  %v1049 = vshll.u32 %v1040, %v1047
  %v1050 = vshrl.u32 %v1032, %v1048
  %v1051 = vor.u32 %v1049, %v1050
  %v1052 = vsub.s32 4294967266, %v1047
  %v1053 = vadd.s32 %v1052, 127
  %v1054 = vshll.u32 %v1053, 23
  %v1055 = vor.u32 4788187, %v1054
  %v1056 = vand.u32 2147483647, %v1055
  %v1058 = vcvt.s32.f32 %v1051
  %v1059 = vmul.f32 %v1058, %v1056
  %v1060 = vxor.u32 %v1059, 2147483648
  %v1061 = vsel %vm978, %v1060, %v1059
  %v1062 = vsub.s32 4, %v1038
  %v1063 = vsel %vm978, %v1062, %v1038
  %v1064 = vsel %vm977, %v973, %v1061
  %v1065 = vsel %vm977, 0, %v1063
  %v1066 = vcosq.f32.pop %v1064
  %v1067 = vsinq.f32.pop %v1064
  %vm1068 = vweird.f32 %v973
  %v1069 = vand.u32 %v1065, 3
  %vm1070 = vcmp.lt.s32.totalorder %v1069, 2
  %vm1071 = vcmp.eq.s32.totalorder %v1069, 0
  %v1072 = vxor.u32 %v1067, 2147483648
  %v1073 = vsel %vm1071, %v1066, %v1072
  %vm1074 = vcmp.eq.s32.totalorder %v1069, 2
  %v1075 = vxor.u32 %v1066, 2147483648
  %v1076 = vsel %vm1074, %v1075, %v1067
  %v1077 = vsel %vm1070, %v1073, %v1076
  %v1078 = vsel %vm1068, nan, %v1077
  %v1079 = vand.u32 2147483647, %v973
  %vm1080 = vcmp.le.f32.partialorder %v1079, 0.7853982
  %vm1081 = vcmp.lt.s32.totalorder %v973, 0
  %v1082 = vand.u32 %v973, 2139095040
  %v1083 = vshrl.u32 %v1082, 23
  %v1084 = vsub.s32 %v1083, 127
  %v1085 = vand.u32 2147483647, %v973
  %v1086 = vand.u32 %v1085, 8388607
  %v1087 = vor.u32 %v1086, 8388608
  %v1088 = vsub.s32 0, %v1087
  %v1089 = vadd.s32 %v1084, 1
  %vm1090 = vcmp.gt.s32.totalorder %v1089, 0
  %v1091 = vsel %vm1090, %v1089, 0
  %v1092 = vshrl.u32 %v1091, 5
  %v1093 = vand.u32 %v1091, 31
  %v1094 = vsub.s32 32, %v1093
  %v1095 = vshrl.u32 683565275, %v1094
  %v1096 = vshll.u32 683565275, %v1093
  %v1097 = vshrl.u32 2475754826, %v1094
  %v1098 = vor.u32 %v1096, %v1097
  %v1099 = vshll.u32 2475754826, %v1093
  %v1100 = vshrl.u32 2131351028, %v1094
  %v1101 = vor.u32 %v1099, %v1100
  %v1102 = vshll.u32 2131351028, %v1093
  %v1103 = vshrl.u32 2102212464, %v1094
  %v1104 = vor.u32 %v1102, %v1103
  %v1105 = vshll.u32 2102212464, %v1093
  %v1106 = vshrl.u32 920167782, %v1094
  %v1107 = vor.u32 %v1105, %v1106
  %v1108 = vshll.u32 920167782, %v1093
  %v1109 = vshrl.u32 1326507024, %v1094
  %v1110 = vor.u32 %v1108, %v1109
  %vm1111 = vcmp.lt.s32.totalorder %v1092, 1
  %vm1112 = vcmp.lt.s32.totalorder %v1092, 2
  %vm1113 = vcmp.lt.s32.totalorder %v1092, 3
  %vm1114 = vcmp.lt.s32.totalorder %v1092, 4
  %v1115 = vsel %vm1111, %v1095, %v1098
  %v1116 = vsel %vm1114, %v1104, 2102212464
  %v1117 = vsel %vm1113, %v1101, %v1116
  %v1118 = vsel %vm1112, %v1115, %v1117
  %v1119 = vsel %vm1111, %v1098, %v1101
  %v1120 = vsel %vm1114, %v1107, 920167782
  %v1121 = vsel %vm1113, %v1104, %v1120
  %v1122 = vsel %vm1112, %v1119, %v1121
  %v1123 = vsel %vm1111, %v1101, %v1104
  %v1124 = vsel %vm1114, %v1110, 1326507024
  %v1125 = vsel %vm1113, %v1107, %v1124
  %v1126 = vsel %vm1112, %v1123, %v1125
  %v1127 = vshll.u32 %v1087, 8
  %v1128 = vmul.u32.u64.compose %v1127, %v1126
  %v1129 = vextract.low.u32 %v1128
  %v1130 = vextract.high.u32 %v1128
  %v1131 = vmul.u32.u64.compose %v1127, %v1122
  %v1132 = vextract.low.u32 %v1131
  %v1133 = vextract.high.u32 %v1131
  %v1134 = vmul.u32 %v1127, %v1118
  %v1135 = vadd.s32 %v1130, %v1132
  %vm1136 = vc.u32 %v1130, %v1132
  %v1137 = vadd.s32 %v1133, 1
  %v1138 = vsel %vm1136, %v1137, %v1133
  %v1139 = vadd.s32 %v1134, %v1138
  %v1140 = vadd.s32 %v1139, 536870912
  %v1141 = vshrl.u32 %v1140, 30
  %v1142 = vshll.u32 %v1141, 30
  %v1143 = vsub.s32 %v1139, %v1142
  %vm1144 = vcmp.lt.s32.totalorder %v1143, 0
  %v1145 = vsub.s32 0, %v1143
  %v1146 = vsel %vm1144, %v1145, %v1143
  %v1147 = vclz %v1146
  %v1148 = vsub.s32 %v1147, 2
  %vm1149 = vcmp.gt.s32.totalorder 0, %v1148
  %v1150 = vsel %vm1149, 0, %v1148
  %v1151 = vsub.s32 32, %v1150
  %v1152 = vshll.u32 %v1143, %v1150
  %v1153 = vshrl.u32 %v1135, %v1151
  %v1154 = vor.u32 %v1152, %v1153
  %v1155 = vsub.s32 4294967266, %v1150
  %v1156 = vadd.s32 %v1155, 127
  %v1157 = vshll.u32 %v1156, 23
  %v1158 = vor.u32 4788187, %v1157
  %v1159 = vand.u32 2147483647, %v1158
  %v1161 = vcvt.s32.f32 %v1154
  %v1162 = vmul.f32 %v1161, %v1159
  %v1163 = vxor.u32 %v1162, 2147483648
  %v1164 = vsel %vm1081, %v1163, %v1162
  %v1165 = vsub.s32 4, %v1141
  %v1166 = vsel %vm1081, %v1165, %v1141
  %v1167 = vsel %vm1080, %v973, %v1164
  %v1168 = vsel %vm1080, 0, %v1166
  %v1169 = vcosq.f32.pop %v1167
  %v1170 = vsinq.f32.pop %v1167
  %vm1171 = vweird.f32 %v973
  %v1172 = vadd.s32 %v1168, 3
  %v1173 = vand.u32 %v1172, 3
  %vm1174 = vcmp.lt.s32.totalorder %v1173, 2
  %vm1175 = vcmp.eq.s32.totalorder %v1173, 0
  %v1176 = vxor.u32 %v1170, 2147483648
  %v1177 = vsel %vm1175, %v1169, %v1176
  %vm1178 = vcmp.eq.s32.totalorder %v1173, 2
  %v1179 = vxor.u32 %v1169, 2147483648
  %v1180 = vsel %vm1178, %v1179, %v1170
  %v1181 = vsel %vm1174, %v1177, %v1180
  %v1182 = vsel %vm1171, nan, %v1181
  %1184 = vrot.lane.b32.xlu0 %v1078, 124
  %v1185 = vpop.permute.xlu0 %1184
  %v1187 = vmul.f32 %v1078, %v1185
  %v1188 = vsub.f32 0.0, %v1078
  %1190 = vrot.lane.b32.xlu0 %v1182, 124
  %v1191 = vpop.permute.xlu0 %1190
  %v1193 = vmul.f32 %v1188, %v1191
  %v1194 = vmul.f32 %v1182, %v1185
  %v1195 = vmul.f32 %v1182, %v1191
  %1197 = vrot.lane.b32.xlu0 %v1187, 8
  %v1198 = vpop.permute.xlu0 %1197
  %v1200 = vmul.f32 %v1078, %v1198
  %1202 = vrot.lane.b32.xlu0 %v1195, 8
  %v1203 = vpop.permute.xlu0 %1202
  %v1205 = vmul.f32 %v1182, %v1203
  %v1206 = vadd.f32 %v1200, %v1205
  %1208 = vrot.lane.b32.xlu0 %v1193, 8
  %v1209 = vpop.permute.xlu0 %1208
  %v1211 = vmul.f32 %v1078, %v1209
  %1213 = vrot.lane.b32.xlu0 %v1194, 8
  %v1214 = vpop.permute.xlu0 %1213
  %v1216 = vmul.f32 %v1182, %v1214
  %v1217 = vsub.f32 %v1211, %v1216
  %v1218 = vmul.f32 %v1182, %v1209
  %v1219 = vmul.f32 %v1078, %v1214
  %v1220 = vadd.f32 %v1218, %v1219
  %v1221 = vsub.f32 0.0, %v1182
  %v1222 = vmul.f32 %v1221, %v1198
  %v1223 = vmul.f32 %v1078, %v1203
  %v1224 = vadd.f32 %v1222, %v1223
  %1226 = vrot.lane.b32.xlu0 %v1206, 4
  %v1227 = vpop.permute.xlu0 %1226
  %v1229 = vmul.f32 %v1078, %v1227
  %1231 = vrot.lane.b32.xlu0 %v1220, 4
  %v1232 = vpop.permute.xlu0 %1231
  %v1234 = vmul.f32 %v1182, %v1232
  %v1235 = vsub.f32 %v1229, %v1234
  %1237 = vrot.lane.b32.xlu0 %v1217, 4
  %v1238 = vpop.permute.xlu0 %1237
  %v1240 = vmul.f32 %v1078, %v1238
  %1242 = vrot.lane.b32.xlu0 %v1224, 4
  %v1243 = vpop.permute.xlu0 %1242
  %v1245 = vmul.f32 %v1182, %v1243
  %v1246 = vsub.f32 %v1240, %v1245
  %v1247 = vmul.f32 %v1182, %v1227
  %v1248 = vmul.f32 %v1078, %v1232
  %v1249 = vadd.f32 %v1247, %v1248
  %v1250 = vmul.f32 %v1182, %v1238
  %v1251 = vmul.f32 %v1078, %v1243
  %v1252 = vadd.f32 %v1250, %v1251
  %1254 = vset.pattern.permute.xlu0 12
  %1255 = vperm.xlu0 %1254, %v1249
  %v1256 = vpop.permute.xlu0 %1255
  %1259 = vset.pattern.permute.xlu0 12
  %1260 = vperm.xlu0 %1259, %v1235
  %v1261 = vpop.permute.xlu0 %1260
  %v1263 = vsel %vm623, %v1256, %v1261
  %1265 = vset.pattern.permute.xlu0 12
  %1266 = vperm.xlu0 %1265, %v1252
  %v1267 = vpop.permute.xlu0 %1266
  %1270 = vset.pattern.permute.xlu0 12
  %1271 = vperm.xlu0 %1270, %v1246
  %v1272 = vpop.permute.xlu0 %1271
  %v1274 = vsel %vm623, %v1267, %v1272
  %1275 = vset.pattern.permute.xlu0 13
  %1276 = vperm.xlu0 %1275, %v1249
  %v1277 = vpop.permute.xlu0 %1276
  %1279 = vset.pattern.permute.xlu0 13
  %1280 = vperm.xlu0 %1279, %v1235
  %v1281 = vpop.permute.xlu0 %1280
  %v1283 = vsel %vm626, %v1277, %v1281
  %1284 = vset.pattern.permute.xlu0 13
  %1285 = vperm.xlu0 %1284, %v1252
  %v1286 = vpop.permute.xlu0 %1285
  %1288 = vset.pattern.permute.xlu0 13
  %1289 = vperm.xlu0 %1288, %v1246
  %v1290 = vpop.permute.xlu0 %1289
  %v1292 = vsel %vm626, %v1286, %v1290
  %v1293 = vmul.f32 %v1263, %v1283
  %v1294 = vmul.f32 %v1274, %v1292
  %v1295 = vsub.f32 %v1293, %v1294
  %v1296 = vmul.f32 %v1263, %v1292
  %v1297 = vmul.f32 %v1274, %v1283
  %v1298 = vadd.f32 %v1296, %v1297
  %1299 = vset.pattern.permute.xlu0 14
  %1300 = vperm.xlu0 %1299, %v1249
  %v1301 = vpop.permute.xlu0 %1300
  %1303 = vset.pattern.permute.xlu0 14
  %1304 = vperm.xlu0 %1303, %v1235
  %v1305 = vpop.permute.xlu0 %1304
  %v1307 = vsel %vm629, %v1301, %v1305
  %1308 = vset.pattern.permute.xlu0 14
  %1309 = vperm.xlu0 %1308, %v1252
  %v1310 = vpop.permute.xlu0 %1309
  %1312 = vset.pattern.permute.xlu0 14
  %1313 = vperm.xlu0 %1312, %v1246
  %v1314 = vpop.permute.xlu0 %1313
  %v1316 = vsel %vm629, %v1310, %v1314
  %v1317 = vmul.f32 %v1295, %v1307
  %v1318 = vmul.f32 %v1298, %v1316
  %v1319 = vsub.f32 %v1317, %v1318
  %v1320 = vmul.f32 %v1295, %v1316
  %v1321 = vmul.f32 %v1298, %v1307
  %v1322 = vadd.f32 %v1320, %v1321
  %1323 = vset.pattern.permute.xlu0 15
  %1324 = vperm.xlu0 %1323, %v1249
  %v1325 = vpop.permute.xlu0 %1324
  %1327 = vset.pattern.permute.xlu0 15
  %1328 = vperm.xlu0 %1327, %v1235
  %v1329 = vpop.permute.xlu0 %1328
  %v1331 = vsel %vm631, %v1325, %v1329
  %1332 = vset.pattern.permute.xlu0 15
  %1333 = vperm.xlu0 %1332, %v1252
  %v1334 = vpop.permute.xlu0 %1333
  %1336 = vset.pattern.permute.xlu0 15
  %1337 = vperm.xlu0 %1336, %v1246
  %v1338 = vpop.permute.xlu0 %1337
  %v1340 = vsel %vm631, %v1334, %v1338
  %v1341 = vmul.f32 %v1319, %v1331
  %v1342 = vmul.f32 %v1322, %v1340
  %v1343 = vsub.f32 %v1341, %v1342
  %v1344 = vmul.f32 %v1319, %v1340
  %v1345 = vmul.f32 %v1322, %v1331
  %v1346 = vadd.f32 %v1344, %v1345
  %1348 = vrot.lane.b32.xlu0 %v1346, 16
  %v1349 = vpop.permute.xlu0 %1348
  %v1351 = vsel %vm128, %v1343, %v1349
  %v1352 = vld [vmem:[%s4] sm:$0xff]
  %v1353 = vld [vmem:[%s4 + $0x8] sm:$0xff]
  %v1354 = vld [vmem:[%s4 + $0x10] sm:$0xff]
  %v1355 = vld [vmem:[%s4 + $0x18] sm:$0xff]
  %v1357 = vsel %vm803, %v1351, 0
  %1359 = vmatprep.subr.mxu0 0.0
  %1360 = vmatpush1.msra.mxu0 %v1352
  %1361 = vmatprep.subr.mxu0 0.0
  %1362 = vmatpush1.msra.mxu0 %v1353
  %1363 = vmatprep.subr.mxu0 0.0
  %1364 = vmatpush1.msra.mxu0 %v1354
  %1365 = vmatprep.subr.mxu0 0.0
  %1366 = vmatpush1.msra.mxu0 %v1355
  %1367 = vmatprep.subr.mxu0 0.0
  %1368 = vmatpush1.msra.mxu0 0.0
  %1369 = vmatprep.subr.mxu0 0.0
  %1370 = vmatpush1.msra.mxu0 0.0
  %1371 = vmatprep.subr.mxu0 0.0
  %1372 = vmatpush1.msra.mxu0 0.0
  %1373 = vmatprep.subr.mxu0 0.0
  %1374 = vmatpush1.msra.mxu0 0.0
  %1375 = vmatprep.subr.mxu0 0.0
  %1376 = vmatpush1.msra.mxu0 0.0
  %1377 = vmatprep.subr.mxu0 0.0
  %1378 = vmatpush1.msra.mxu0 0.0
  %1379 = vmatprep.subr.mxu0 0.0
  %1380 = vmatpush1.msra.mxu0 0.0
  %1381 = vmatprep.subr.mxu0 0.0
  %1382 = vmatpush1.msra.mxu0 0.0
  %1383 = vmatprep.subr.mxu0 0.0
  %1384 = vmatpush1.msra.mxu0 0.0
  %1385 = vmatprep.subr.mxu0 0.0
  %1386 = vmatpush1.msra.mxu0 0.0
  %1387 = vmatprep.subr.mxu0 0.0
  %1388 = vmatpush1.msra.mxu0 0.0
  %1389 = vmatprep.subr.mxu0 0.0
  %1390 = vmatpush1.msra.mxu0 0.0
  %1391 = vmatprep.subr.mxu0 0.0
  %1392 = vmatpush1.msra.mxu0 0.0
  %1393 = vmatprep.subr.mxu0 0.0
  %1394 = vmatpush1.msra.mxu0 0.0
  %1395 = vmatprep.subr.mxu0 0.0
  %1396 = vmatpush1.msra.mxu0 0.0
  %1397 = vmatprep.subr.mxu0 0.0
  %1398 = vmatpush1.msra.mxu0 0.0
  %1399 = vmatprep.subr.mxu0 0.0
  %1400 = vmatpush1.msra.mxu0 0.0
  %1401 = vmatprep.subr.mxu0 0.0
  %1402 = vmatpush1.msra.mxu0 0.0
  %1403 = vmatprep.subr.mxu0 0.0
  %1404 = vmatpush1.msra.mxu0 0.0
  %1405 = vmatprep.subr.mxu0 0.0
  %1406 = vmatpush1.msra.mxu0 0.0
  %1407 = vmatprep.subr.mxu0 0.0
  %1408 = vmatpush1.msra.mxu0 0.0
  %1409 = vmatprep.subr.mxu0 0.0
  %1410 = vmatpush1.msra.mxu0 0.0
  %1411 = vmatprep.subr.mxu0 0.0
  %1412 = vmatpush1.msra.mxu0 0.0
  %1413 = vmatprep.subr.mxu0 0.0
  %1414 = vmatpush1.msra.mxu0 0.0
  %1415 = vmatprep.subr.mxu0 0.0
  %1416 = vmatpush1.msra.mxu0 0.0
  %1417 = vmatprep.subr.mxu0 0.0
  %1418 = vmatpush1.msra.mxu0 0.0
  %1419 = vmatprep.subr.mxu0 0.0
  %1420 = vmatpush1.msra.mxu0 0.0
  %1421 = vmatprep.subr.mxu0 0.0
  %1422 = vmatpush1.msra.mxu0 0.0
  %1423 = vmatprep.mubr.f32.mxu0 0.0
  %1424 = vmatmul.mubr.f32.gmra.mrb[0].mxu0 %v1357
  %v1425 = vpop.f32.mrb[0].mxu0
  %v1426 = vadd.f32 0.0, %v1425
  %v1427 = vpop.f32.mrb[0].mxu0
  %1428 = vdwg.mxu0
  %v1429 = vmul.f32 %v1426, %v1426
  %v1430 = vld [vmem:[%s5] sm:$0xff]
  %v1431 = vld [vmem:[%s5 + $0x8] sm:$0xff]
  %v1432 = vld [vmem:[%s5 + $0x10] sm:$0xff]
  %v1433 = vld [vmem:[%s5 + $0x18] sm:$0xff]
  %v1435 = vsel %vm803, %v1429, 0
  %1437 = vmatprep.subr.mxu0 0.0
  %1438 = vmatpush1.msra.mxu0 %v1430
  %1439 = vmatprep.subr.mxu0 0.0
  %1440 = vmatpush1.msra.mxu0 %v1431
  %1441 = vmatprep.subr.mxu0 0.0
  %1442 = vmatpush1.msra.mxu0 %v1432
  %1443 = vmatprep.subr.mxu0 0.0
  %1444 = vmatpush1.msra.mxu0 %v1433
  %1445 = vmatprep.subr.mxu0 0.0
  %1446 = vmatpush1.msra.mxu0 0.0
  %1447 = vmatprep.subr.mxu0 0.0
  %1448 = vmatpush1.msra.mxu0 0.0
  %1449 = vmatprep.subr.mxu0 0.0
  %1450 = vmatpush1.msra.mxu0 0.0
  %1451 = vmatprep.subr.mxu0 0.0
  %1452 = vmatpush1.msra.mxu0 0.0
  %1453 = vmatprep.subr.mxu0 0.0
  %1454 = vmatpush1.msra.mxu0 0.0
  %1455 = vmatprep.subr.mxu0 0.0
  %1456 = vmatpush1.msra.mxu0 0.0
  %1457 = vmatprep.subr.mxu0 0.0
  %1458 = vmatpush1.msra.mxu0 0.0
  %1459 = vmatprep.subr.mxu0 0.0
  %1460 = vmatpush1.msra.mxu0 0.0
  %1461 = vmatprep.subr.mxu0 0.0
  %1462 = vmatpush1.msra.mxu0 0.0
  %1463 = vmatprep.subr.mxu0 0.0
  %1464 = vmatpush1.msra.mxu0 0.0
  %1465 = vmatprep.subr.mxu0 0.0
  %1466 = vmatpush1.msra.mxu0 0.0
  %1467 = vmatprep.subr.mxu0 0.0
  %1468 = vmatpush1.msra.mxu0 0.0
  %1469 = vmatprep.subr.mxu0 0.0
  %1470 = vmatpush1.msra.mxu0 0.0
  %1471 = vmatprep.subr.mxu0 0.0
  %1472 = vmatpush1.msra.mxu0 0.0
  %1473 = vmatprep.subr.mxu0 0.0
  %1474 = vmatpush1.msra.mxu0 0.0
  %1475 = vmatprep.subr.mxu0 0.0
  %1476 = vmatpush1.msra.mxu0 0.0
  %1477 = vmatprep.subr.mxu0 0.0
  %1478 = vmatpush1.msra.mxu0 0.0
  %1479 = vmatprep.subr.mxu0 0.0
  %1480 = vmatpush1.msra.mxu0 0.0
  %1481 = vmatprep.subr.mxu0 0.0
  %1482 = vmatpush1.msra.mxu0 0.0
  %1483 = vmatprep.subr.mxu0 0.0
  %1484 = vmatpush1.msra.mxu0 0.0
  %1485 = vmatprep.subr.mxu0 0.0
  %1486 = vmatpush1.msra.mxu0 0.0
  %1487 = vmatprep.subr.mxu0 0.0
  %1488 = vmatpush1.msra.mxu0 0.0
  %1489 = vmatprep.subr.mxu0 0.0
  %1490 = vmatpush1.msra.mxu0 0.0
  %1491 = vmatprep.subr.mxu0 0.0
  %1492 = vmatpush1.msra.mxu0 0.0
  %1493 = vmatprep.subr.mxu0 0.0
  %1494 = vmatpush1.msra.mxu0 0.0
  %1495 = vmatprep.subr.mxu0 0.0
  %1496 = vmatpush1.msra.mxu0 0.0
  %1497 = vmatprep.subr.mxu0 0.0
  %1498 = vmatpush1.msra.mxu0 0.0
  %1499 = vmatprep.subr.mxu0 0.0
  %1500 = vmatpush1.msra.mxu0 0.0
  %1501 = vmatprep.mubr.f32.mxu0 0.0
  %1502 = vmatmul.mubr.f32.gmra.mrb[0].mxu0 %v1435
  %v1503 = vpop.f32.mrb[0].mxu0
  %v1504 = vadd.f32 0.0, %v1503
  %v1505 = vpop.f32.mrb[0].mxu0
  %1506 = vdwg.mxu0
  %vm1507 = vcmask 31744
  %v1508 = vsel %vm1507, %v1504, -inf
  %1509 = vmax.xlane.f32.xlu0 %v1508
  %v1510 = vpop.xlane.xlu0 %1509
  %v1511 = vsub.f32 %v1504, %v1510
  %v1512 = vmul.f32 %v1511, 1.442695
  %v1513 = vpow.pop %v1512
  %v1514 = vsel %vm1507, %v1513, 0.0
  %1515 = vadd.xlane.f32.xlu0 %v1514
  %v1516 = vpop.xlane.xlu0 %1515
  %v1517 = vlog2.pop %v1516
  %v1518 = vmul.f32 %v1517, 0.6931472
  %v1519 = vadd.f32 %v1518, %v1510
  %v1520 = vsub.f32 %v1504, %v1519
  %1521 = vst.msk [vmem:[%s6] sm:$0xff] %vm1507, %v1520
  // Predicated region
  $region26: #{tpu_custom_call.1} parent=0 // pred_check
    _
  $region27: #{tpu_custom_call.1} parent=0 // pred_check_branch
    %1523 = sbr.rel (0) target = $region29
  $region28: #{tpu_custom_call.1} parent=0 // pred_region
    _
  $region29: #{tpu_custom_call.1} parent=0 // pred_fallthru
    _
  // Predicated region
  $region30: #{tpu_custom_call.1} parent=0 // pred_check
    _
  $region31: #{tpu_custom_call.1} parent=0 // pred_check_branch
    %1525 = sbr.rel (0) target = $region33
  $region32: #{tpu_custom_call.1} parent=0 // pred_region
    _
  $region33: #{tpu_custom_call.1} parent=0 // pred_fallthru
    _

</llo_original>
